<compile_context>
chip_gen: v5e
topology: v5e:2x2
jax: 0.10.0
libtpu: 0.0.40
codegen_flags: <defaults>
</compile_context>

<pallas_src>
import jax
import jax.numpy as jnp
from jax.experimental import pallas as pl
from jax.experimental.pallas import tpu as pltpu

IN_FEATURES = 8 * 8 * 1536      # 98304, fixed by nn.Linear(8*8*1536, 5)
NUM_CLASSES = 5
NP = 8                          # classes padded 5 -> 8 (sublane-friendly)
K_HALF = IN_FEATURES // 2       # 49152 = per-model feature count
K_CHUNK = 6144                  # 8 grid steps; 2*6144 = 12288 features per step
NEG_BIG = -1e30                 # padded-class bias => exp() underflows to 0


def _head_kernel(f1_ref, f2_ref, w1_ref, w2_ref, b_ref, o_ref, acc_ref):
    """K-chunked GEMV with fused bias + softmax epilogue.

    Per step: acc += f1_chunk @ w1_chunk^T + f2_chunk @ w2_chunk^T   (f32 acc)
    Last step: logits = acc + bias (padded classes at -1e30), softmax over NP,
               store the first NUM_CLASSES probabilities.
    """
    k = pl.program_id(0)

    @pl.when(k == 0)
    def _():
        acc_ref[...] = jnp.zeros_like(acc_ref)

    # f32 -> bf16 cast in-kernel (activations are the small operand; f32 accum
    # on the MXU bounds the rounding error across the 98k-wide reduction).
    a1 = f1_ref[...].astype(jnp.bfloat16)
    a2 = f2_ref[...].astype(jnp.bfloat16)
    acc_ref[...] += (
        jax.lax.dot_general(
            a1, w1_ref[...],
            dimension_numbers=(((1,), (1,)), ((), ())),   # A @ W^T, K on lanes
            preferred_element_type=jnp.float32)
        + jax.lax.dot_general(
            a2, w2_ref[...],
            dimension_numbers=(((1,), (1,)), ((), ())),
            preferred_element_type=jnp.float32)
    )

    @pl.when(k == pl.num_programs(0) - 1)
    def _():
        logits = acc_ref[...] + b_ref[...]                 # (B, NP)
        m = jnp.max(logits, axis=-1, keepdims=True)
        e = jnp.exp(logits - m)                            # padded classes -> 0
        s = jnp.sum(e, axis=-1, keepdims=True)
        probs = e / s
        o_ref[...] = probs[:, :NUM_CLASSES]


def model1_features(x):
    # TODO(synk): CNN1(chanells=1, fc_activation='relu') is unspecified; stand-in
    # flattens each sample to 49152 features (free reshape, no HBM copy).
    return x.reshape(x.shape[0], -1)


def model2_features(y):
    # TODO(synk): CNN2(fc_activation='relu') is unspecified; stand-in flattens.
    return y.reshape(y.shape[0], -1)


def prepare_block1_params(w_pt, b):
    """One-time prep: PyTorch [5, F] f32 weight -> two padded [8, F/2] bf16 slabs;
    bias -> padded [1, 8] f32 with -1e30 on padded classes (softmax mask)."""
    w_pad = (jnp.zeros((NP, IN_FEATURES), jnp.float32)
             .at[:NUM_CLASSES].set(w_pt)
             .astype(jnp.bfloat16))
    w1 = w_pad[:, :K_HALF]          # pairs with CNN1 features (concat order)
    w2 = w_pad[:, K_HALF:]          # pairs with CNN2 features
    b_pad = (jnp.full((1, NP), NEG_BIG, jnp.float32)
             .at[:, :NUM_CLASSES].set(b.reshape(1, NUM_CLASSES)))
    return w1, w2, b_pad


def _block1_head(f1, f2, w1, w2, b_pad):
    B = f1.shape[0]
    n_steps = K_HALF // K_CHUNK
    return pl.pallas_call(
        _head_kernel,
        out_shape=jax.ShapeDtypeStruct((B, NUM_CLASSES), jnp.float32),
        grid=(n_steps,),
        in_specs=[
            pl.BlockSpec((B, K_CHUNK), lambda k: (0, k)),    # CNN1 features (f32)
            pl.BlockSpec((B, K_CHUNK), lambda k: (0, k)),    # CNN2 features (f32)
            pl.BlockSpec((NP, K_CHUNK), lambda k: (0, k)),   # weight half 1 (bf16)
            pl.BlockSpec((NP, K_CHUNK), lambda k: (0, k)),   # weight half 2 (bf16)
            pl.BlockSpec((1, NP), lambda k: (0, 0)),         # padded bias
        ],
        out_specs=pl.BlockSpec((B, NUM_CLASSES), lambda k: (0, 0)),
        scratch_shapes=[pltpu.VMEM((B, NP), jnp.float32)],   # f32 accumulator
        compiler_params=pltpu.CompilerParams(
            dimension_semantics=("arbitrary",),              # K reduction axis
        ),
        cost_estimate=pl.CostEstimate(
            flops=2 * B * NP * IN_FEATURES,
            transcendentals=B * NP,
            bytes_accessed=(B * IN_FEATURES * 4      # f32 activations
                            + NP * IN_FEATURES * 2   # bf16 weights
                            + NP * 4                 # bias
                            + B * NUM_CLASSES * 4),  # output
        ),
    )(f1, f2, w1, w2, b_pad)


@jax.jit
def cnnf_forward(x, y, w1, w2, b_pad):
    """forward: cat((model1(x), model2(y)), dim=1) -> Linear -> Softmax(dim=1),
    with concat/bias/softmax all fused into the single Pallas head kernel."""
    f1 = model1_features(x)
    f2 = model2_features(y)
    return _block1_head(f1, f2, w1, w2, b_pad)


if __name__ == "__main__":
    key = jax.random.PRNGKey(0)
    kx, ky, kw, kb = jax.random.split(key, 4)

    B = 2
    # x: NCHW 1-channel input to CNN1; y: NCHW 3-channel input to CNN2.
    # Chosen so flattened features concat to exactly 8*8*1536 = 98304.
    x = jax.random.normal(kx, (B, 1, 64, 768), dtype=jnp.float32)   # 49152 feats
    y = jax.random.normal(ky, (B, 3, 128, 128), dtype=jnp.float32)  # 49152 feats

    # Block1 parameters in PyTorch layout: weight [out=5, in=98304], bias [1, 5].
    w_pt = (jax.random.normal(kw, (NUM_CLASSES, IN_FEATURES), dtype=jnp.float32)
            * (1.0 / jnp.sqrt(jnp.float32(IN_FEATURES))))
    b = jax.random.normal(kb, (1, NUM_CLASSES), dtype=jnp.float32) * 0.01

    # Load-time prep (padding, bf16 weight slabs, masked bias).
    w1, w2, b_pad = prepare_block1_params(w_pt, b)

    out = jax.block_until_ready(cnnf_forward(x, y, w1, w2, b_pad))

    # f32 reference.
    feat_ref = jnp.concatenate([x.reshape(B, -1), y.reshape(B, -1)], axis=1)
    ref = jax.nn.softmax(feat_ref @ w_pt.T + b, axis=1)

    assert out.shape == (B, NUM_CLASSES)
    assert bool(jnp.allclose(jnp.sum(out, axis=1), 1.0, atol=1e-5))
    assert bool(jnp.allclose(out, ref, atol=2e-2))

    print("KERNEL_OK")
</pallas_src>

<mosaic_0001>
module attributes {stable_mosaic.version = 11 : i64} {
  func.func @_head_kernel(%arg0: i32, %arg1: memref<2x6144xf32, #tpu.memory_space<vmem>>, %arg2: memref<2x6144xf32, #tpu.memory_space<vmem>>, %arg3: memref<8x6144xbf16, #tpu.memory_space<vmem>>, %arg4: memref<8x6144xbf16, #tpu.memory_space<vmem>>, %arg5: memref<1x8xf32, #tpu.memory_space<vmem>>, %arg6: memref<2x5xf32, #tpu.memory_space<vmem>>, %arg7: memref<2x8xf32, #tpu.memory_space<vmem>>) attributes {dimension_semantics = [#tpu.dimension_semantics<arbitrary>], iteration_bounds = array<i64: 8>, scalar_prefetch = 0 : i64, scratch_operands = 1 : i64, tpu.core_type = #tpu.core_type<tc>, window_params = [{transform_indices = @transform_0, window_bounds = array<i64: 2, 6144>}, {transform_indices = @transform_1, window_bounds = array<i64: 2, 6144>}, {transform_indices = @transform_2, window_bounds = array<i64: 8, 6144>}, {transform_indices = @transform_3, window_bounds = array<i64: 8, 6144>}, {pipeline_mode = #tpu.pipeline_mode<synchronous>, transform_indices = @transform_4, window_bounds = array<i64: 1, 8>}, {pipeline_mode = #tpu.pipeline_mode<synchronous>, transform_indices = @transform_5, window_bounds = array<i64: 2, 5>}]} {
    %c0_i32 = arith.constant 0 : i32
    %0 = arith.cmpi eq, %arg0, %c0_i32 : i32
    %1 = arith.extui %0 : i1 to i32
    %c0_i32_0 = arith.constant 0 : i32
    %2 = arith.cmpi ne, %1, %c0_i32_0 : i32
    scf.if %2 {
      %cst_14 = arith.constant 0.000000e+00 : f32
      %18 = vector.broadcast %cst_14 : f32 to vector<2x8xf32>
      %c0_15 = arith.constant 0 : index
      %c0_16 = arith.constant 0 : index
      %19 = vector.load %arg7[%c0_15, %c0_16] : memref<2x8xf32, #tpu.memory_space<vmem>>, vector<2x8xf32>
      tpu.vector_store %arg7[%c0_15, %c0_16], %18 {strides = array<i32>} : memref<2x8xf32, #tpu.memory_space<vmem>>, vector<2x8xf32>,
    } else {
    }
    %c0 = arith.constant 0 : index
    %c0_1 = arith.constant 0 : index
    %3 = vector.load %arg1[%c0, %c0_1] : memref<2x6144xf32, #tpu.memory_space<vmem>>, vector<2x6144xf32>
    %4 = arith.truncf %3 : vector<2x6144xf32> to vector<2x6144xbf16>
    %c0_2 = arith.constant 0 : index
    %c0_3 = arith.constant 0 : index
    %5 = vector.load %arg2[%c0_2, %c0_3] : memref<2x6144xf32, #tpu.memory_space<vmem>>, vector<2x6144xf32>
    %6 = arith.truncf %5 : vector<2x6144xf32> to vector<2x6144xbf16>
    %c0_4 = arith.constant 0 : index
    %c0_5 = arith.constant 0 : index
    %7 = vector.load %arg7[%c0_4, %c0_5] : memref<2x8xf32, #tpu.memory_space<vmem>>, vector<2x8xf32>
    %c0_6 = arith.constant 0 : index
    %c0_7 = arith.constant 0 : index
    %8 = vector.load %arg3[%c0_6, %c0_7] : memref<8x6144xbf16, #tpu.memory_space<vmem>>, vector<8x6144xbf16>
    %cst = arith.constant dense<0.000000e+00> : vector<2x8xf32>
    %9 = tpu.matmul %4, %8, %cst {dimension_numbers = #tpu.dot_dimension_numbers<[1], [1], [0], [0], [0, 0, 1, 0], [], []>} : vector<2x6144xbf16>, vector<8x6144xbf16>, vector<2x8xf32> -> vector<2x8xf32>
    %c0_8 = arith.constant 0 : index
    %c0_9 = arith.constant 0 : index
    %10 = vector.load %arg4[%c0_8, %c0_9] : memref<8x6144xbf16, #tpu.memory_space<vmem>>, vector<8x6144xbf16>
    %cst_10 = arith.constant dense<0.000000e+00> : vector<2x8xf32>
    %11 = tpu.matmul %6, %10, %cst_10 {dimension_numbers = #tpu.dot_dimension_numbers<[1], [1], [0], [0], [0, 0, 1, 0], [], []>} : vector<2x6144xbf16>, vector<8x6144xbf16>, vector<2x8xf32> -> vector<2x8xf32>
    %12 = arith.addf %9, %11 : vector<2x8xf32>
    %13 = arith.addf %7, %12 : vector<2x8xf32>
    %c0_11 = arith.constant 0 : index
    %c0_12 = arith.constant 0 : index
    %14 = vector.load %arg7[%c0_11, %c0_12] : memref<2x8xf32, #tpu.memory_space<vmem>>, vector<2x8xf32>
    tpu.vector_store %arg7[%c0_11, %c0_12], %13 {strides = array<i32>} : memref<2x8xf32, #tpu.memory_space<vmem>>, vector<2x8xf32>,
    %c7_i32 = arith.constant 7 : i32
    %15 = arith.cmpi eq, %arg0, %c7_i32 : i32
    %16 = arith.extui %15 : i1 to i32
    %c0_i32_13 = arith.constant 0 : i32
    %17 = arith.cmpi ne, %16, %c0_i32_13 : i32
    scf.if %17 {
      %c0_14 = arith.constant 0 : index
      %c0_15 = arith.constant 0 : index
      %18 = vector.load %arg7[%c0_14, %c0_15] : memref<2x8xf32, #tpu.memory_space<vmem>>, vector<2x8xf32>
      %c0_16 = arith.constant 0 : index
      %c0_17 = arith.constant 0 : index
      %19 = vector.load %arg5[%c0_16, %c0_17] : memref<1x8xf32, #tpu.memory_space<vmem>>, vector<1x8xf32>
      %20 = vector.broadcast %19 : vector<1x8xf32> to vector<2x8xf32>
      %21 = arith.addf %18, %20 : vector<2x8xf32>
      %cst_18 = arith.constant dense<0xFF800000> : vector<2xf32>
      %22 = vector.multi_reduction <maximumf>, %21, %cst_18 [1] : vector<2x8xf32> to vector<2xf32>
      %23 = vector.shape_cast %22 : vector<2xf32> to vector<2x1xf32>
      %24 = vector.broadcast %23 : vector<2x1xf32> to vector<2x8xf32>
      %25 = arith.subf %21, %24 : vector<2x8xf32>
      %26 = math.exp %25 : vector<2x8xf32>
      %cst_19 = arith.constant dense<0.000000e+00> : vector<2xf32>
      %27 = vector.multi_reduction <add>, %26, %cst_19 [1] : vector<2x8xf32> to vector<2xf32>
      %28 = vector.shape_cast %27 : vector<2xf32> to vector<2x1xf32>
      %29 = vector.broadcast %28 : vector<2x1xf32> to vector<2x8xf32>
      %30 = arith.divf %26, %29 : vector<2x8xf32>
      %31 = vector.extract_strided_slice %30 {offsets = [0, 0], sizes = [2, 5], strides = [1, 1]} : vector<2x8xf32> to vector<2x5xf32>
      %c0_20 = arith.constant 0 : index
      %c0_21 = arith.constant 0 : index
      %32 = vector.load %arg6[%c0_20, %c0_21] : memref<2x5xf32, #tpu.memory_space<vmem>>, vector<2x5xf32>
      tpu.vector_store %arg6[%c0_20, %c0_21], %31 {strides = array<i32>} : memref<2x5xf32, #tpu.memory_space<vmem>>, vector<2x5xf32>,
    } else {
    }
    return
  }
  func.func @transform_0(%arg0: i32) -> (i32, i32) {
    %c0_i32 = arith.constant 0 : i32
    %c0_i32_0 = arith.constant 0 : i32
    return %c0_i32, %arg0 : i32, i32
  }
  func.func @transform_1(%arg0: i32) -> (i32, i32) {
    %c0_i32 = arith.constant 0 : i32
    %c0_i32_0 = arith.constant 0 : i32
    return %c0_i32, %arg0 : i32, i32
  }
  func.func @transform_2(%arg0: i32) -> (i32, i32) {
    %c0_i32 = arith.constant 0 : i32
    %c0_i32_0 = arith.constant 0 : i32
    return %c0_i32, %arg0 : i32, i32
  }
  func.func @transform_3(%arg0: i32) -> (i32, i32) {
    %c0_i32 = arith.constant 0 : i32
    %c0_i32_0 = arith.constant 0 : i32
    return %c0_i32, %arg0 : i32, i32
  }
  func.func @transform_4(%arg0: i32) -> (i32, i32) {
    %c0_i32 = arith.constant 0 : i32
    %c0_i32_0 = arith.constant 0 : i32
    %c0_i32_1 = arith.constant 0 : i32
    return %c0_i32, %c0_i32_0 : i32, i32
  }
  func.func @transform_5(%arg0: i32) -> (i32, i32) {
    %c0_i32 = arith.constant 0 : i32
    %c0_i32_0 = arith.constant 0 : i32
    %c0_i32_1 = arith.constant 0 : i32
    return %c0_i32, %c0_i32_0 : i32, i32
  }
}

</mosaic_0001>

<llo_original>
// kernel: cnnf_forward.1
$region0: #{cnnf_forward.1}
  #allocation0 [shape = 'u32[]', space=smem, size = 0x4, offset = 0x4, fixed_abs, tag = 'smem constant byte address 0x4 - core index']
  #allocation1 [shape = 'u32[72,128]{1,0:T(1,128)}', space=vmem, size = 0x9000, scoped, tag = 'internal scratch']
  #allocation2 [shape = 'f32[2,8]{1,0:T(2,128)}', space=vmem, size = 0x400, scoped, tag = 'scratch operand']
  %s0 = inlined_call_operand.vmem [shape: f32[2,49152], index: 0, kind: input, shape index: {}]
  %s1 = inlined_call_operand.vmem [shape: f32[2,49152], index: 1, kind: input, shape index: {}]
  %s2 = inlined_call_operand.vmem [shape: bf16[8,49152], index: 2, kind: input, shape index: {}]
  %s3 = inlined_call_operand.vmem [shape: bf16[8,49152], index: 3, kind: input, shape index: {}]
  %s4 = inlined_call_operand.hbm [shape: f32[1,8], index: 4, kind: input, shape index: {}]
  %s5 = inlined_call_operand.hbm [shape: f32[2,5], index: 5, kind: output, shape index: {}]
  %s6 = sld [smem:[#allocation0]]
  $region65: #{cnnf_forward.1} parent=0
    _
  %s8 = ssub.s32 1, %s6
  %s9 = scalar_select 0, %s8, %s6
  $region1: #{cnnf_forward.1} parent=0
    #allocation3 [shape = 'u8[512]{0}', space=vmem, size = 0x400, scoped, tag = 'input window, operand 4, single buffered']
    #allocation4 [shape = 's32[2]{0}', space=sflag, size = 0x8, scoped, tag = 'scoped memory for cnnf_forward.1']
    #allocation5 [shape = 's32[2]{0}', space=sflag, size = 0x8, scoped, tag = 'scoped memory for cnnf_forward.1']
    #allocation6 [shape = 'u8[1024]{0}', space=vmem, size = 0x400, scoped, tag = 'output window, operand 0, single buffered']
    %10 = vsyncpa [#allocation4], 0
    %11 = vsyncpa [#allocation5], 0
    loop: start=0, step=1, limit=10
    $region2: #{cnnf_forward.1} parent=1 // loop_pre_header
      _
    $region3: #{cnnf_forward.1} parent=1 // loop_header
      %s13 = sphi 0, %s17
      %p14 = scmp.ge.s32.totalorder %s13, 10
      %s23 = sphi 0, %s25
      %s26 = sphi 0, %s23
      %s27 = sphi 0, %s26
      %s43 = sphi 0, %s27
      %s49 = sphi 0, %s51
      %s52 = sphi 0, %s49
      %s53 = sphi 0, %s52
      %s69 = sphi 0, %s53
      %s75 = sphi 0, %s77
      %s78 = sphi 0, %s75
      %s79 = sphi 0, %s78
      %s95 = sphi 0, %s79
      %s101 = sphi 0, %s103
      %s104 = sphi 0, %s101
      %s105 = sphi 0, %s104
      %s121 = sphi 0, %s105
      %s125 = sphi 0, %s125
      %s127 = sphi 0, %s125
      %s128 = sphi 0, %s127
      %s142 = sphi 0, %s128
      %s146 = sphi 0, %s146
      %s148 = sphi 0, %s146
      %s149 = sphi 0, %s148
      %s163 = sphi 0, %s149
    $region4: #{cnnf_forward.1} parent=1 // loop_header_branch
      %16 = sbr.rel (%p14) target = $region8
    $region5: #{cnnf_forward.1} parent=1 // loop_body
      %s18 = ssub.s32 %s13, 1
      %s19 = ssub.s32 %s13, 2
      %s20 = sadd.s32 %s13, 1
      %s21 = ssub.s32 %s13, %s20
      %p22 = scmp.eq.s32.totalorder %s21, 0
      %s24 = sadd.s32 %s23, 1
      %s25 = scalar_select %p22, %s23, %s24
      %p28 = pneg %p22
      %p29 = scmp.eq.s32.totalorder %s13, 7
      %p30 = por %p28, %p29
      %p31 = scmp.ne.s32.totalorder %s23, %s26
      %p32 = scmp.eq.s32.totalorder %s13, 0
      %p33 = por %p31, %p32
      %p34 = scmp.ne.s32.totalorder %s23, %s26
      %p35 = scmp.eq.s32.totalorder %s18, 7
      %p36 = por %p34, %p35
      %p37 = scmp.ne.s32.totalorder %s26, %s27
      %p38 = scmp.eq.s32.totalorder %s18, 0
      %p39 = por %p37, %p38
      %p40 = scmp.ne.s32.totalorder %s26, %s27
      %p41 = scmp.eq.s32.totalorder %s19, 7
      %p42 = por %p40, %p41
      %p44 = scmp.ne.s32.totalorder %s27, %s43
      %p45 = scmp.eq.s32.totalorder %s19, 0
      %p46 = por %p44, %p45
      %s47 = ssub.s32 %s13, %s20
      %p48 = scmp.eq.s32.totalorder %s47, 0
      %s50 = sadd.s32 %s49, 1
      %s51 = scalar_select %p48, %s49, %s50
      %p54 = pneg %p48
      %p55 = scmp.eq.s32.totalorder %s13, 7
      %p56 = por %p54, %p55
      %p57 = scmp.ne.s32.totalorder %s49, %s52
      %p58 = scmp.eq.s32.totalorder %s13, 0
      %p59 = por %p57, %p58
      %p60 = scmp.ne.s32.totalorder %s49, %s52
      %p61 = scmp.eq.s32.totalorder %s18, 7
      %p62 = por %p60, %p61
      %p63 = scmp.ne.s32.totalorder %s52, %s53
      %p64 = scmp.eq.s32.totalorder %s18, 0
      %p65 = por %p63, %p64
      %p66 = scmp.ne.s32.totalorder %s52, %s53
      %p67 = scmp.eq.s32.totalorder %s19, 7
      %p68 = por %p66, %p67
      %p70 = scmp.ne.s32.totalorder %s53, %s69
      %p71 = scmp.eq.s32.totalorder %s19, 0
      %p72 = por %p70, %p71
      %s73 = ssub.s32 %s13, %s20
      %p74 = scmp.eq.s32.totalorder %s73, 0
      %s76 = sadd.s32 %s75, 1
      %s77 = scalar_select %p74, %s75, %s76
      %p80 = pneg %p74
      %p81 = scmp.eq.s32.totalorder %s13, 7
      %p82 = por %p80, %p81
      %p83 = scmp.ne.s32.totalorder %s75, %s78
      %p84 = scmp.eq.s32.totalorder %s13, 0
      %p85 = por %p83, %p84
      %p86 = scmp.ne.s32.totalorder %s75, %s78
      %p87 = scmp.eq.s32.totalorder %s18, 7
      %p88 = por %p86, %p87
      %p89 = scmp.ne.s32.totalorder %s78, %s79
      %p90 = scmp.eq.s32.totalorder %s18, 0
      %p91 = por %p89, %p90
      %p92 = scmp.ne.s32.totalorder %s78, %s79
      %p93 = scmp.eq.s32.totalorder %s19, 7
      %p94 = por %p92, %p93
      %p96 = scmp.ne.s32.totalorder %s79, %s95
      %p97 = scmp.eq.s32.totalorder %s19, 0
      %p98 = por %p96, %p97
      %s99 = ssub.s32 %s13, %s20
      %p100 = scmp.eq.s32.totalorder %s99, 0
      %s102 = sadd.s32 %s101, 1
      %s103 = scalar_select %p100, %s101, %s102
      %p106 = pneg %p100
      %p107 = scmp.eq.s32.totalorder %s13, 7
      %p108 = por %p106, %p107
      %p109 = scmp.ne.s32.totalorder %s101, %s104
      %p110 = scmp.eq.s32.totalorder %s13, 0
      %p111 = por %p109, %p110
      %p112 = scmp.ne.s32.totalorder %s101, %s104
      %p113 = scmp.eq.s32.totalorder %s18, 7
      %p114 = por %p112, %p113
      %p115 = scmp.ne.s32.totalorder %s104, %s105
      %p116 = scmp.eq.s32.totalorder %s18, 0
      %p117 = por %p115, %p116
      %p118 = scmp.ne.s32.totalorder %s104, %s105
      %p119 = scmp.eq.s32.totalorder %s19, 7
      %p120 = por %p118, %p119
      %p122 = scmp.ne.s32.totalorder %s105, %s121
      %p123 = scmp.eq.s32.totalorder %s19, 0
      %p124 = por %p122, %p123
      %s126 = sadd.s32 %s125, 1
      %p129 = scmp.eq.s32.totalorder %s13, 7
      %p130 = scmp.ne.s32.totalorder %s125, %s127
      %p131 = scmp.eq.s32.totalorder %s13, 0
      %p132 = por %p130, %p131
      %p133 = scmp.ne.s32.totalorder %s125, %s127
      %p134 = scmp.eq.s32.totalorder %s18, 7
      %p135 = por %p133, %p134
      %p136 = scmp.ne.s32.totalorder %s127, %s128
      %p137 = scmp.eq.s32.totalorder %s18, 0
      %p138 = por %p136, %p137
      %p139 = scmp.ne.s32.totalorder %s127, %s128
      %p140 = scmp.eq.s32.totalorder %s19, 7
      %p141 = por %p139, %p140
      %p143 = scmp.ne.s32.totalorder %s128, %s142
      %p144 = scmp.eq.s32.totalorder %s19, 0
      %p145 = por %p143, %p144
      %s147 = sadd.s32 %s146, 1
      %p150 = scmp.eq.s32.totalorder %s13, 7
      %p151 = scmp.ne.s32.totalorder %s146, %s148
      %p152 = scmp.eq.s32.totalorder %s13, 0
      %p153 = por %p151, %p152
      %p154 = scmp.ne.s32.totalorder %s146, %s148
      %p155 = scmp.eq.s32.totalorder %s18, 7
      %p156 = por %p154, %p155
      %p157 = scmp.ne.s32.totalorder %s148, %s149
      %p158 = scmp.eq.s32.totalorder %s18, 0
      %p159 = por %p157, %p158
      %p160 = scmp.ne.s32.totalorder %s148, %s149
      %p161 = scmp.eq.s32.totalorder %s19, 7
      %p162 = por %p160, %p161
      %p164 = scmp.ne.s32.totalorder %s149, %s163
      %p165 = scmp.eq.s32.totalorder %s19, 0
      %p166 = por %p164, %p165
      %p167 = scmp.le.s32.totalorder 1, %s13
      %p168 = scmp.lt.s32.totalorder %s13, 9
      %p169 = pnand %p167, %p168
      %p170 = pneg %p169
      // Predicated region
      $region9: #{cnnf_forward.1} parent=5 // pred_check
        _
      $region10: #{cnnf_forward.1} parent=5 // pred_check_branch
        %172 = sbr.rel (%p169) target = $region12
      $region11: #{cnnf_forward.1} parent=5 // pred_region
        %s173 = ssub.s32 %s13, 1
        // Predicated region
        $region13: #{cnnf_forward.1} parent=11 // pred_check
          %p174 = pneg %p138
        $region14: #{cnnf_forward.1} parent=11 // pred_check_branch
          %176 = sbr.rel (%p174) target = $region16
        $region15: #{cnnf_forward.1} parent=11 // pred_region
          %178 = vsyncadd [#allocation4], 0
          %s180 = sshll.u32 %s4, 4
          %s181 = int_to_ptr.hbm [resolvable:$true] %s180
          %s182 = sshll.u32 [#allocation3], 4
          %s183 = int_to_ptr.vmem [resolvable:$true] %s182
          %185 = dma.hbm_to_vmem [thread:$0]  %s181, 16, %s183, [#allocation4]
        $region16: #{cnnf_forward.1} parent=11 // pred_fallthru
          _
      $region12: #{cnnf_forward.1} parent=5 // pred_fallthru
        _
      %p186 = scmp.lt.s32.totalorder %s13, 8
      // Predicated region
      $region17: #{cnnf_forward.1} parent=5 // pred_check
        %p187 = pneg %p186
      $region18: #{cnnf_forward.1} parent=5 // pred_check_branch
        %189 = sbr.rel (%p187) target = $region20
      $region19: #{cnnf_forward.1} parent=5 // pred_region
        // Predicated region
        $region21: #{cnnf_forward.1} parent=19 // pred_check
          %p190 = pneg %p33
        $region22: #{cnnf_forward.1} parent=19 // pred_check_branch
          %192 = sbr.rel (%p190) target = $region24
        $region23: #{cnnf_forward.1} parent=19 // pred_region
          %s193 = smul.u32 48, %s13
          %p194 = scmp.lt.s32.totalorder %s193, 383
          %s195 = scalar_select %p194, %s193, 383
          %s196 = smul.addr %s195, 2
          %s197 = scalar_lea.vmem %s0, %s196
          %s198 = smul.u32 48, %s13
        $region24: #{cnnf_forward.1} parent=19 // pred_fallthru
          _
        // Predicated region
        $region25: #{cnnf_forward.1} parent=19 // pred_check
          %p199 = pneg %p59
        $region26: #{cnnf_forward.1} parent=19 // pred_check_branch
          %201 = sbr.rel (%p199) target = $region28
        $region27: #{cnnf_forward.1} parent=19 // pred_region
          %s202 = smul.u32 48, %s13
          %p203 = scmp.lt.s32.totalorder %s202, 383
          %s204 = scalar_select %p203, %s202, 383
          %s205 = smul.addr %s204, 2
          %s206 = scalar_lea.vmem %s1, %s205
          %s207 = smul.u32 48, %s13
        $region28: #{cnnf_forward.1} parent=19 // pred_fallthru
          _
        // Predicated region
        $region29: #{cnnf_forward.1} parent=19 // pred_check
          %p208 = pneg %p85
        $region30: #{cnnf_forward.1} parent=19 // pred_check_branch
          %210 = sbr.rel (%p208) target = $region32
        $region31: #{cnnf_forward.1} parent=19 // pred_region
          %s211 = smul.u32 48, %s13
          %p212 = scmp.lt.s32.totalorder %s211, 383
          %s213 = scalar_select %p212, %s211, 383
          %s214 = smul.addr %s213, 4
          %s215 = scalar_lea.vmem %s2, %s214
          %s216 = smul.u32 48, %s13
        $region32: #{cnnf_forward.1} parent=19 // pred_fallthru
          _
        // Predicated region
        $region33: #{cnnf_forward.1} parent=19 // pred_check
          %p217 = pneg %p111
        $region34: #{cnnf_forward.1} parent=19 // pred_check_branch
          %219 = sbr.rel (%p217) target = $region36
        $region35: #{cnnf_forward.1} parent=19 // pred_region
          %s220 = smul.u32 48, %s13
          %p221 = scmp.lt.s32.totalorder %s220, 383
          %s222 = scalar_select %p221, %s220, 383
          %s223 = smul.addr %s222, 4
          %s224 = scalar_lea.vmem %s3, %s223
          %s225 = smul.u32 48, %s13
        $region36: #{cnnf_forward.1} parent=19 // pred_fallthru
          _
      $region20: #{cnnf_forward.1} parent=5 // pred_fallthru
        _
      %p226 = scmp.le.s32.totalorder 1, %s13
      %p227 = scmp.lt.s32.totalorder %s13, 9
      %p228 = pnand %p226, %p227
      %p229 = pneg %p228
      // Predicated region
      $region37: #{cnnf_forward.1} parent=5 // pred_check
        _
      $region38: #{cnnf_forward.1} parent=5 // pred_check_branch
        %231 = sbr.rel (%p228) target = $region40
      $region39: #{cnnf_forward.1} parent=5 // pred_region
        %s232 = ssub.s32 %s13, 1
        // Predicated region
        $region41: #{cnnf_forward.1} parent=39 // pred_check
          %p233 = pneg %p138
        $region42: #{cnnf_forward.1} parent=39 // pred_check_branch
          %235 = sbr.rel (%p233) target = $region44
        $region43: #{cnnf_forward.1} parent=39 // pred_region
          %237 = dma.done [#allocation4], 16
        $region44: #{cnnf_forward.1} parent=39 // pred_fallthru
          _
        %s238 = smul.u32 48, %s18
        %p239 = scmp.lt.s32.totalorder %s238, 383
        %s240 = scalar_select %p239, %s238, 383
        %s241 = smul.addr %s240, 2
        %s242 = scalar_lea.vmem %s0, %s241
        %p243 = pneg %p39
        %p244 = pneg %p36
        %s245 = smul.u32 48, %s18
        %p246 = scmp.lt.s32.totalorder %s245, 383
        %s247 = scalar_select %p246, %s245, 383
        %s248 = smul.addr %s247, 2
        %s249 = scalar_lea.vmem %s1, %s248
        %p250 = pneg %p65
        %p251 = pneg %p62
        %s252 = smul.u32 48, %s18
        %p253 = scmp.lt.s32.totalorder %s252, 383
        %s254 = scalar_select %p253, %s252, 383
        %s255 = smul.addr %s254, 4
        %s256 = scalar_lea.vmem %s2, %s255
        %p257 = pneg %p91
        %p258 = pneg %p88
        %s259 = smul.u32 48, %s18
        %p260 = scmp.lt.s32.totalorder %s259, 383
        %s261 = scalar_select %p260, %s259, 383
        %s262 = smul.addr %s261, 4
        %s263 = scalar_lea.vmem %s3, %s262
        %p264 = pneg %p117
        %p265 = pneg %p114
        %p266 = pneg %p138
        %p267 = pneg %p135
        %p268 = pneg %p159
        %p269 = pneg %p156
        %s270 = smul.u32 48, %s18
        %p271 = scmp.lt.s32.totalorder %s270, 383
        %s272 = scalar_select %p271, %s270, 383
        %s273 = smul.addr %s272, 2
        %s274 = scalar_lea.vmem %s0, %s273
        %s275 = smul.u32 48, %s18
        %s276 = smul.u32 48, %s18
        %p277 = scmp.lt.s32.totalorder %s276, 383
        %s278 = scalar_select %p277, %s276, 383
        %s279 = smul.addr %s278, 2
        %s280 = scalar_lea.vmem %s1, %s279
        %s281 = smul.u32 48, %s18
        %s282 = smul.u32 48, %s18
        %p283 = scmp.lt.s32.totalorder %s282, 383
        %s284 = scalar_select %p283, %s282, 383
        %s285 = smul.addr %s284, 4
        %s286 = scalar_lea.vmem %s2, %s285
        %s287 = smul.u32 48, %s18
        %s288 = smul.u32 48, %s18
        %p289 = scmp.lt.s32.totalorder %s288, 383
        %s290 = scalar_select %p289, %s288, 383
        %s291 = smul.addr %s290, 4
        %s292 = scalar_lea.vmem %s3, %s291
        %s293 = smul.u32 48, %s18
        %p295 = scmp.eq.s32.totalorder %s18, 0
        // Predicated region
        $region45: #{cnnf_forward.1} parent=39 // pred_check
          %p296 = pneg %p295
        $region46: #{cnnf_forward.1} parent=39 // pred_check_branch
          %298 = sbr.rel (%p296) target = $region48
        $region47: #{cnnf_forward.1} parent=39 // pred_region
          %vm299 = vcmask 58368
          %300 = vst.msk [vmem:[#allocation2] sm:$0x3] %vm299, 0.0
        $region48: #{cnnf_forward.1} parent=39 // pred_fallthru
          _
        %v301 = vld [vmem:[%s274] sm:$0xff]
        %v302 = vld [vmem:[%s274 + $0x8] sm:$0xff]
        %v303 = vld [vmem:[%s274 + $0x10] sm:$0xff]
        %v304 = vld [vmem:[%s274 + $0x18] sm:$0xff]
        %v305 = vld [vmem:[%s274 + $0x20] sm:$0xff]
        %v306 = vld [vmem:[%s274 + $0x28] sm:$0xff]
        %v307 = vld [vmem:[%s274 + $0x30] sm:$0xff]
        %v308 = vld [vmem:[%s274 + $0x38] sm:$0xff]
        %v309 = vld [vmem:[%s274 + $0x40] sm:$0xff]
        %v310 = vld [vmem:[%s274 + $0x48] sm:$0xff]
        %v311 = vld [vmem:[%s274 + $0x50] sm:$0xff]
        %v312 = vld [vmem:[%s274 + $0x58] sm:$0xff]
        %325 = vst [vmem:[#allocation1] ss:$4 sm:$0xff] %v301
        %s326 = scalar_lea.vmem [#allocation1], 32
        %327 = vst [vmem:[%s326] ss:$4 sm:$0xff] %v302
        %v328 = vld.sshfl [vmem:[#allocation1] sm:$0xff pattern:$0x73625140]
        %v329 = vld.sshfl [vmem:[#allocation1 + $0x8] sm:$0xff pattern:$0x73625140]
        %v330 = vld.sshfl [vmem:[#allocation1 + $0x10] sm:$0xff pattern:$0x73625140]
        %v331 = vld.sshfl [vmem:[#allocation1 + $0x18] sm:$0xff pattern:$0x73625140]
        %v332 = vld.sshfl [vmem:[#allocation1 + $0x20] sm:$0xff pattern:$0x73625140]
        %v333 = vld.sshfl [vmem:[#allocation1 + $0x28] sm:$0xff pattern:$0x73625140]
        %v334 = vld.sshfl [vmem:[#allocation1 + $0x30] sm:$0xff pattern:$0x73625140]
        %v335 = vld.sshfl [vmem:[#allocation1 + $0x38] sm:$0xff pattern:$0x73625140]
        %336 = vst [vmem:[#allocation1] ss:$4 sm:$0xff] %v303
        %337 = vst [vmem:[%s326] ss:$4 sm:$0xff] %v304
        %v338 = vld.sshfl [vmem:[#allocation1] sm:$0xff pattern:$0x73625140]
        %v339 = vld.sshfl [vmem:[#allocation1 + $0x8] sm:$0xff pattern:$0x73625140]
        %v340 = vld.sshfl [vmem:[#allocation1 + $0x10] sm:$0xff pattern:$0x73625140]
        %v341 = vld.sshfl [vmem:[#allocation1 + $0x18] sm:$0xff pattern:$0x73625140]
        %v342 = vld.sshfl [vmem:[#allocation1 + $0x20] sm:$0xff pattern:$0x73625140]
        %v343 = vld.sshfl [vmem:[#allocation1 + $0x28] sm:$0xff pattern:$0x73625140]
        %v344 = vld.sshfl [vmem:[#allocation1 + $0x30] sm:$0xff pattern:$0x73625140]
        %v345 = vld.sshfl [vmem:[#allocation1 + $0x38] sm:$0xff pattern:$0x73625140]
        %346 = vst [vmem:[#allocation1] ss:$4 sm:$0xff] %v305
        %347 = vst [vmem:[%s326] ss:$4 sm:$0xff] %v306
        %v348 = vld.sshfl [vmem:[#allocation1] sm:$0xff pattern:$0x73625140]
        %v349 = vld.sshfl [vmem:[#allocation1 + $0x8] sm:$0xff pattern:$0x73625140]
        %v350 = vld.sshfl [vmem:[#allocation1 + $0x10] sm:$0xff pattern:$0x73625140]
        %v351 = vld.sshfl [vmem:[#allocation1 + $0x18] sm:$0xff pattern:$0x73625140]
        %v352 = vld.sshfl [vmem:[#allocation1 + $0x20] sm:$0xff pattern:$0x73625140]
        %v353 = vld.sshfl [vmem:[#allocation1 + $0x28] sm:$0xff pattern:$0x73625140]
        %v354 = vld.sshfl [vmem:[#allocation1 + $0x30] sm:$0xff pattern:$0x73625140]
        %v355 = vld.sshfl [vmem:[#allocation1 + $0x38] sm:$0xff pattern:$0x73625140]
        %356 = vst [vmem:[#allocation1] ss:$4 sm:$0xff] %v307
        %357 = vst [vmem:[%s326] ss:$4 sm:$0xff] %v308
        %v358 = vld.sshfl [vmem:[#allocation1] sm:$0xff pattern:$0x73625140]
        %v359 = vld.sshfl [vmem:[#allocation1 + $0x8] sm:$0xff pattern:$0x73625140]
        %v360 = vld.sshfl [vmem:[#allocation1 + $0x10] sm:$0xff pattern:$0x73625140]
        %v361 = vld.sshfl [vmem:[#allocation1 + $0x18] sm:$0xff pattern:$0x73625140]
        %v362 = vld.sshfl [vmem:[#allocation1 + $0x20] sm:$0xff pattern:$0x73625140]
        %v363 = vld.sshfl [vmem:[#allocation1 + $0x28] sm:$0xff pattern:$0x73625140]
        %v364 = vld.sshfl [vmem:[#allocation1 + $0x30] sm:$0xff pattern:$0x73625140]
        %v365 = vld.sshfl [vmem:[#allocation1 + $0x38] sm:$0xff pattern:$0x73625140]
        %366 = vst [vmem:[#allocation1] ss:$4 sm:$0xff] %v309
        %367 = vst [vmem:[%s326] ss:$4 sm:$0xff] %v310
        %v368 = vld.sshfl [vmem:[#allocation1] sm:$0xff pattern:$0x73625140]
        %v369 = vld.sshfl [vmem:[#allocation1 + $0x8] sm:$0xff pattern:$0x73625140]
        %v370 = vld.sshfl [vmem:[#allocation1 + $0x10] sm:$0xff pattern:$0x73625140]
        %v371 = vld.sshfl [vmem:[#allocation1 + $0x18] sm:$0xff pattern:$0x73625140]
        %v372 = vld.sshfl [vmem:[#allocation1 + $0x20] sm:$0xff pattern:$0x73625140]
        %v373 = vld.sshfl [vmem:[#allocation1 + $0x28] sm:$0xff pattern:$0x73625140]
        %v374 = vld.sshfl [vmem:[#allocation1 + $0x30] sm:$0xff pattern:$0x73625140]
        %v375 = vld.sshfl [vmem:[#allocation1 + $0x38] sm:$0xff pattern:$0x73625140]
        %376 = vst [vmem:[#allocation1] ss:$4 sm:$0xff] %v311
        %377 = vst [vmem:[%s326] ss:$4 sm:$0xff] %v312
        %v378 = vld.sshfl [vmem:[#allocation1] sm:$0xff pattern:$0x73625140]
        %v379 = vld.sshfl [vmem:[#allocation1 + $0x8] sm:$0xff pattern:$0x73625140]
        %v380 = vld.sshfl [vmem:[#allocation1 + $0x10] sm:$0xff pattern:$0x73625140]
        %v381 = vld.sshfl [vmem:[#allocation1 + $0x18] sm:$0xff pattern:$0x73625140]
        %v382 = vld.sshfl [vmem:[#allocation1 + $0x20] sm:$0xff pattern:$0x73625140]
        %v383 = vld.sshfl [vmem:[#allocation1 + $0x28] sm:$0xff pattern:$0x73625140]
        %v384 = vld.sshfl [vmem:[#allocation1 + $0x30] sm:$0xff pattern:$0x73625140]
        %v385 = vld.sshfl [vmem:[#allocation1 + $0x38] sm:$0xff pattern:$0x73625140]
        %v434 = vpack.c.bf16 %v328, %v328
        %v435 = vpack.c.bf16 %v329, %v329
        %v436 = vpack.c.bf16 %v330, %v330
        %v437 = vpack.c.bf16 %v331, %v331
        %v438 = vpack.c.bf16 %v332, %v332
        %v439 = vpack.c.bf16 %v333, %v333
        %v440 = vpack.c.bf16 %v334, %v334
        %v441 = vpack.c.bf16 %v335, %v335
        %v442 = vpack.c.bf16 %v338, %v338
        %v443 = vpack.c.bf16 %v339, %v339
        %v444 = vpack.c.bf16 %v340, %v340
        %v445 = vpack.c.bf16 %v341, %v341
        %v446 = vpack.c.bf16 %v342, %v342
        %v447 = vpack.c.bf16 %v343, %v343
        %v448 = vpack.c.bf16 %v344, %v344
        %v449 = vpack.c.bf16 %v345, %v345
        %v450 = vpack.c.bf16 %v348, %v348
        %v451 = vpack.c.bf16 %v349, %v349
        %v452 = vpack.c.bf16 %v350, %v350
        %v453 = vpack.c.bf16 %v351, %v351
        %v454 = vpack.c.bf16 %v352, %v352
        %v455 = vpack.c.bf16 %v353, %v353
        %v456 = vpack.c.bf16 %v354, %v354
        %v457 = vpack.c.bf16 %v355, %v355
        %v458 = vpack.c.bf16 %v358, %v358
        %v459 = vpack.c.bf16 %v359, %v359
        %v460 = vpack.c.bf16 %v360, %v360
        %v461 = vpack.c.bf16 %v361, %v361
        %v462 = vpack.c.bf16 %v362, %v362
        %v463 = vpack.c.bf16 %v363, %v363
        %v464 = vpack.c.bf16 %v364, %v364
        %v465 = vpack.c.bf16 %v365, %v365
        %v466 = vpack.c.bf16 %v368, %v368
        %v467 = vpack.c.bf16 %v369, %v369
        %v468 = vpack.c.bf16 %v370, %v370
        %v469 = vpack.c.bf16 %v371, %v371
        %v470 = vpack.c.bf16 %v372, %v372
        %v471 = vpack.c.bf16 %v373, %v373
        %v472 = vpack.c.bf16 %v374, %v374
        %v473 = vpack.c.bf16 %v375, %v375
        %v474 = vpack.c.bf16 %v378, %v378
        %v475 = vpack.c.bf16 %v379, %v379
        %v476 = vpack.c.bf16 %v380, %v380
        %v477 = vpack.c.bf16 %v381, %v381
        %v478 = vpack.c.bf16 %v382, %v382
        %v479 = vpack.c.bf16 %v383, %v383
        %v480 = vpack.c.bf16 %v384, %v384
        %v481 = vpack.c.bf16 %v385, %v385
        %v482 = vld [vmem:[%s280] sm:$0xff]
        %v483 = vld [vmem:[%s280 + $0x8] sm:$0xff]
        %v484 = vld [vmem:[%s280 + $0x10] sm:$0xff]
        %v485 = vld [vmem:[%s280 + $0x18] sm:$0xff]
        %v486 = vld [vmem:[%s280 + $0x20] sm:$0xff]
        %v487 = vld [vmem:[%s280 + $0x28] sm:$0xff]
        %v488 = vld [vmem:[%s280 + $0x30] sm:$0xff]
        %v489 = vld [vmem:[%s280 + $0x38] sm:$0xff]
        %v490 = vld [vmem:[%s280 + $0x40] sm:$0xff]
        %v491 = vld [vmem:[%s280 + $0x48] sm:$0xff]
        %v492 = vld [vmem:[%s280 + $0x50] sm:$0xff]
        %v493 = vld [vmem:[%s280 + $0x58] sm:$0xff]
        %506 = vst [vmem:[#allocation1] ss:$4 sm:$0xff] %v482
        %s507 = scalar_lea.vmem [#allocation1], 32
        %508 = vst [vmem:[%s507] ss:$4 sm:$0xff] %v483
        %v509 = vld.sshfl [vmem:[#allocation1] sm:$0xff pattern:$0x73625140]
        %v510 = vld.sshfl [vmem:[#allocation1 + $0x8] sm:$0xff pattern:$0x73625140]
        %v511 = vld.sshfl [vmem:[#allocation1 + $0x10] sm:$0xff pattern:$0x73625140]
        %v512 = vld.sshfl [vmem:[#allocation1 + $0x18] sm:$0xff pattern:$0x73625140]
        %v513 = vld.sshfl [vmem:[#allocation1 + $0x20] sm:$0xff pattern:$0x73625140]
        %v514 = vld.sshfl [vmem:[#allocation1 + $0x28] sm:$0xff pattern:$0x73625140]
        %v515 = vld.sshfl [vmem:[#allocation1 + $0x30] sm:$0xff pattern:$0x73625140]
        %v516 = vld.sshfl [vmem:[#allocation1 + $0x38] sm:$0xff pattern:$0x73625140]
        %517 = vst [vmem:[#allocation1] ss:$4 sm:$0xff] %v484
        %518 = vst [vmem:[%s507] ss:$4 sm:$0xff] %v485
        %v519 = vld.sshfl [vmem:[#allocation1] sm:$0xff pattern:$0x73625140]
        %v520 = vld.sshfl [vmem:[#allocation1 + $0x8] sm:$0xff pattern:$0x73625140]
        %v521 = vld.sshfl [vmem:[#allocation1 + $0x10] sm:$0xff pattern:$0x73625140]
        %v522 = vld.sshfl [vmem:[#allocation1 + $0x18] sm:$0xff pattern:$0x73625140]
        %v523 = vld.sshfl [vmem:[#allocation1 + $0x20] sm:$0xff pattern:$0x73625140]
        %v524 = vld.sshfl [vmem:[#allocation1 + $0x28] sm:$0xff pattern:$0x73625140]
        %v525 = vld.sshfl [vmem:[#allocation1 + $0x30] sm:$0xff pattern:$0x73625140]
        %v526 = vld.sshfl [vmem:[#allocation1 + $0x38] sm:$0xff pattern:$0x73625140]
        %527 = vst [vmem:[#allocation1] ss:$4 sm:$0xff] %v486
        %528 = vst [vmem:[%s507] ss:$4 sm:$0xff] %v487
        %v529 = vld.sshfl [vmem:[#allocation1] sm:$0xff pattern:$0x73625140]
        %v530 = vld.sshfl [vmem:[#allocation1 + $0x8] sm:$0xff pattern:$0x73625140]
        %v531 = vld.sshfl [vmem:[#allocation1 + $0x10] sm:$0xff pattern:$0x73625140]
        %v532 = vld.sshfl [vmem:[#allocation1 + $0x18] sm:$0xff pattern:$0x73625140]
        %v533 = vld.sshfl [vmem:[#allocation1 + $0x20] sm:$0xff pattern:$0x73625140]
        %v534 = vld.sshfl [vmem:[#allocation1 + $0x28] sm:$0xff pattern:$0x73625140]
        %v535 = vld.sshfl [vmem:[#allocation1 + $0x30] sm:$0xff pattern:$0x73625140]
        %v536 = vld.sshfl [vmem:[#allocation1 + $0x38] sm:$0xff pattern:$0x73625140]
        %537 = vst [vmem:[#allocation1] ss:$4 sm:$0xff] %v488
        %538 = vst [vmem:[%s507] ss:$4 sm:$0xff] %v489
        %v539 = vld.sshfl [vmem:[#allocation1] sm:$0xff pattern:$0x73625140]
        %v540 = vld.sshfl [vmem:[#allocation1 + $0x8] sm:$0xff pattern:$0x73625140]
        %v541 = vld.sshfl [vmem:[#allocation1 + $0x10] sm:$0xff pattern:$0x73625140]
        %v542 = vld.sshfl [vmem:[#allocation1 + $0x18] sm:$0xff pattern:$0x73625140]
        %v543 = vld.sshfl [vmem:[#allocation1 + $0x20] sm:$0xff pattern:$0x73625140]
        %v544 = vld.sshfl [vmem:[#allocation1 + $0x28] sm:$0xff pattern:$0x73625140]
        %v545 = vld.sshfl [vmem:[#allocation1 + $0x30] sm:$0xff pattern:$0x73625140]
        %v546 = vld.sshfl [vmem:[#allocation1 + $0x38] sm:$0xff pattern:$0x73625140]
        %547 = vst [vmem:[#allocation1] ss:$4 sm:$0xff] %v490
        %548 = vst [vmem:[%s507] ss:$4 sm:$0xff] %v491
        %v549 = vld.sshfl [vmem:[#allocation1] sm:$0xff pattern:$0x73625140]
        %v550 = vld.sshfl [vmem:[#allocation1 + $0x8] sm:$0xff pattern:$0x73625140]
        %v551 = vld.sshfl [vmem:[#allocation1 + $0x10] sm:$0xff pattern:$0x73625140]
        %v552 = vld.sshfl [vmem:[#allocation1 + $0x18] sm:$0xff pattern:$0x73625140]
        %v553 = vld.sshfl [vmem:[#allocation1 + $0x20] sm:$0xff pattern:$0x73625140]
        %v554 = vld.sshfl [vmem:[#allocation1 + $0x28] sm:$0xff pattern:$0x73625140]
        %v555 = vld.sshfl [vmem:[#allocation1 + $0x30] sm:$0xff pattern:$0x73625140]
        %v556 = vld.sshfl [vmem:[#allocation1 + $0x38] sm:$0xff pattern:$0x73625140]
        %557 = vst [vmem:[#allocation1] ss:$4 sm:$0xff] %v492
        %558 = vst [vmem:[%s507] ss:$4 sm:$0xff] %v493
        %v559 = vld.sshfl [vmem:[#allocation1] sm:$0xff pattern:$0x73625140]
        %v560 = vld.sshfl [vmem:[#allocation1 + $0x8] sm:$0xff pattern:$0x73625140]
        %v561 = vld.sshfl [vmem:[#allocation1 + $0x10] sm:$0xff pattern:$0x73625140]
        %v562 = vld.sshfl [vmem:[#allocation1 + $0x18] sm:$0xff pattern:$0x73625140]
        %v563 = vld.sshfl [vmem:[#allocation1 + $0x20] sm:$0xff pattern:$0x73625140]
        %v564 = vld.sshfl [vmem:[#allocation1 + $0x28] sm:$0xff pattern:$0x73625140]
        %v565 = vld.sshfl [vmem:[#allocation1 + $0x30] sm:$0xff pattern:$0x73625140]
        %v566 = vld.sshfl [vmem:[#allocation1 + $0x38] sm:$0xff pattern:$0x73625140]
        %v615 = vpack.c.bf16 %v509, %v509
        %v616 = vpack.c.bf16 %v510, %v510
        %v617 = vpack.c.bf16 %v511, %v511
        %v618 = vpack.c.bf16 %v512, %v512
        %v619 = vpack.c.bf16 %v513, %v513
        %v620 = vpack.c.bf16 %v514, %v514
        %v621 = vpack.c.bf16 %v515, %v515
        %v622 = vpack.c.bf16 %v516, %v516
        %v623 = vpack.c.bf16 %v519, %v519
        %v624 = vpack.c.bf16 %v520, %v520
        %v625 = vpack.c.bf16 %v521, %v521
        %v626 = vpack.c.bf16 %v522, %v522
        %v627 = vpack.c.bf16 %v523, %v523
        %v628 = vpack.c.bf16 %v524, %v524
        %v629 = vpack.c.bf16 %v525, %v525
        %v630 = vpack.c.bf16 %v526, %v526
        %v631 = vpack.c.bf16 %v529, %v529
        %v632 = vpack.c.bf16 %v530, %v530
        %v633 = vpack.c.bf16 %v531, %v531
        %v634 = vpack.c.bf16 %v532, %v532
        %v635 = vpack.c.bf16 %v533, %v533
        %v636 = vpack.c.bf16 %v534, %v534
        %v637 = vpack.c.bf16 %v535, %v535
        %v638 = vpack.c.bf16 %v536, %v536
        %v639 = vpack.c.bf16 %v539, %v539
        %v640 = vpack.c.bf16 %v540, %v540
        %v641 = vpack.c.bf16 %v541, %v541
        %v642 = vpack.c.bf16 %v542, %v542
        %v643 = vpack.c.bf16 %v543, %v543
        %v644 = vpack.c.bf16 %v544, %v544
        %v645 = vpack.c.bf16 %v545, %v545
        %v646 = vpack.c.bf16 %v546, %v546
        %v647 = vpack.c.bf16 %v549, %v549
        %v648 = vpack.c.bf16 %v550, %v550
        %v649 = vpack.c.bf16 %v551, %v551
        %v650 = vpack.c.bf16 %v552, %v552
        %v651 = vpack.c.bf16 %v553, %v553
        %v652 = vpack.c.bf16 %v554, %v554
        %v653 = vpack.c.bf16 %v555, %v555
        %v654 = vpack.c.bf16 %v556, %v556
        %v655 = vpack.c.bf16 %v559, %v559
        %v656 = vpack.c.bf16 %v560, %v560
        %v657 = vpack.c.bf16 %v561, %v561
        %v658 = vpack.c.bf16 %v562, %v562
        %v659 = vpack.c.bf16 %v563, %v563
        %v660 = vpack.c.bf16 %v564, %v564
        %v661 = vpack.c.bf16 %v565, %v565
        %v662 = vpack.c.bf16 %v566, %v566
        %v663 = vld [vmem:[#allocation2] sm:$0x3]
        %v664 = vld [vmem:[%s286] sm:$0xff]
        %v665 = vld [vmem:[%s286 + $0x8] sm:$0xff]
        %v666 = vld [vmem:[%s286 + $0x10] sm:$0xff]
        %v667 = vld [vmem:[%s286 + $0x18] sm:$0xff]
        %v668 = vld [vmem:[%s286 + $0x20] sm:$0xff]
        %v669 = vld [vmem:[%s286 + $0x28] sm:$0xff]
        %v670 = vld [vmem:[%s286 + $0x30] sm:$0xff]
        %v671 = vld [vmem:[%s286 + $0x38] sm:$0xff]
        %v672 = vld [vmem:[%s286 + $0x40] sm:$0xff]
        %v673 = vld [vmem:[%s286 + $0x48] sm:$0xff]
        %v674 = vld [vmem:[%s286 + $0x50] sm:$0xff]
        %v675 = vld [vmem:[%s286 + $0x58] sm:$0xff]
        %v676 = vld [vmem:[%s286 + $0x60] sm:$0xff]
        %v677 = vld [vmem:[%s286 + $0x68] sm:$0xff]
        %v678 = vld [vmem:[%s286 + $0x70] sm:$0xff]
        %v679 = vld [vmem:[%s286 + $0x78] sm:$0xff]
        %v680 = vld [vmem:[%s286 + $0x80] sm:$0xff]
        %v681 = vld [vmem:[%s286 + $0x88] sm:$0xff]
        %v682 = vld [vmem:[%s286 + $0x90] sm:$0xff]
        %v683 = vld [vmem:[%s286 + $0x98] sm:$0xff]
        %v684 = vld [vmem:[%s286 + $0xa0] sm:$0xff]
        %v685 = vld [vmem:[%s286 + $0xa8] sm:$0xff]
        %v686 = vld [vmem:[%s286 + $0xb0] sm:$0xff]
        %v687 = vld [vmem:[%s286 + $0xb8] sm:$0xff]
        %v688 = vld [vmem:[%s292] sm:$0xff]
        %v689 = vld [vmem:[%s292 + $0x8] sm:$0xff]
        %v690 = vld [vmem:[%s292 + $0x10] sm:$0xff]
        %v691 = vld [vmem:[%s292 + $0x18] sm:$0xff]
        %v692 = vld [vmem:[%s292 + $0x20] sm:$0xff]
        %v693 = vld [vmem:[%s292 + $0x28] sm:$0xff]
        %v694 = vld [vmem:[%s292 + $0x30] sm:$0xff]
        %v695 = vld [vmem:[%s292 + $0x38] sm:$0xff]
        %v696 = vld [vmem:[%s292 + $0x40] sm:$0xff]
        %v697 = vld [vmem:[%s292 + $0x48] sm:$0xff]
        %v698 = vld [vmem:[%s292 + $0x50] sm:$0xff]
        %v699 = vld [vmem:[%s292 + $0x58] sm:$0xff]
        %v700 = vld [vmem:[%s292 + $0x60] sm:$0xff]
        %v701 = vld [vmem:[%s292 + $0x68] sm:$0xff]
        %v702 = vld [vmem:[%s292 + $0x70] sm:$0xff]
        %v703 = vld [vmem:[%s292 + $0x78] sm:$0xff]
        %v704 = vld [vmem:[%s292 + $0x80] sm:$0xff]
        %v705 = vld [vmem:[%s292 + $0x88] sm:$0xff]
        %v706 = vld [vmem:[%s292 + $0x90] sm:$0xff]
        %v707 = vld [vmem:[%s292 + $0x98] sm:$0xff]
        %v708 = vld [vmem:[%s292 + $0xa0] sm:$0xff]
        %v709 = vld [vmem:[%s292 + $0xa8] sm:$0xff]
        %v710 = vld [vmem:[%s292 + $0xb0] sm:$0xff]
        %v711 = vld [vmem:[%s292 + $0xb8] sm:$0xff]
        %v736 = vunpack.c.l.b16 %v688
        %v737 = vunpack.c.h.b16 %v688
        %v738 = vunpack.c.l.b16 %v689
        %v739 = vunpack.c.h.b16 %v689
        %v740 = vunpack.c.l.b16 %v690
        %v741 = vunpack.c.h.b16 %v690
        %v742 = vunpack.c.l.b16 %v691
        %v743 = vunpack.c.h.b16 %v691
        %v744 = vunpack.c.l.b16 %v692
        %v745 = vunpack.c.h.b16 %v692
        %v746 = vunpack.c.l.b16 %v693
        %v747 = vunpack.c.h.b16 %v693
        %v748 = vunpack.c.l.b16 %v694
        %v749 = vunpack.c.h.b16 %v694
        %v750 = vunpack.c.l.b16 %v695
        %v751 = vunpack.c.h.b16 %v695
        %v752 = vunpack.c.l.b16 %v696
        %v753 = vunpack.c.h.b16 %v696
        %v754 = vunpack.c.l.b16 %v697
        %v755 = vunpack.c.h.b16 %v697
        %v756 = vunpack.c.l.b16 %v698
        %v757 = vunpack.c.h.b16 %v698
        %v758 = vunpack.c.l.b16 %v699
        %v759 = vunpack.c.h.b16 %v699
        %v760 = vunpack.c.l.b16 %v700
        %v761 = vunpack.c.h.b16 %v700
        %v762 = vunpack.c.l.b16 %v701
        %v763 = vunpack.c.h.b16 %v701
        %v764 = vunpack.c.l.b16 %v702
        %v765 = vunpack.c.h.b16 %v702
        %v766 = vunpack.c.l.b16 %v703
        %v767 = vunpack.c.h.b16 %v703
        %v768 = vunpack.c.l.b16 %v704
        %v769 = vunpack.c.h.b16 %v704
        %v770 = vunpack.c.l.b16 %v705
        %v771 = vunpack.c.h.b16 %v705
        %v772 = vunpack.c.l.b16 %v706
        %v773 = vunpack.c.h.b16 %v706
        %v774 = vunpack.c.l.b16 %v707
        %v775 = vunpack.c.h.b16 %v707
        %v776 = vunpack.c.l.b16 %v708
        %v777 = vunpack.c.h.b16 %v708
        %v778 = vunpack.c.l.b16 %v709
        %v779 = vunpack.c.h.b16 %v709
        %v780 = vunpack.c.l.b16 %v710
        %v781 = vunpack.c.h.b16 %v710
        %v782 = vunpack.c.l.b16 %v711
        %v783 = vunpack.c.h.b16 %v711
        %v784 = vpack.c.b16 %v736, %v736
        %v785 = vpack.c.b16 %v737, %v737
        %v786 = vpack.c.b16 %v738, %v738
        %v787 = vpack.c.b16 %v739, %v739
        %v788 = vpack.c.b16 %v740, %v740
        %v789 = vpack.c.b16 %v741, %v741
        %v790 = vpack.c.b16 %v742, %v742
        %v791 = vpack.c.b16 %v743, %v743
        %v792 = vpack.c.b16 %v744, %v744
        %v793 = vpack.c.b16 %v745, %v745
        %v794 = vpack.c.b16 %v746, %v746
        %v795 = vpack.c.b16 %v747, %v747
        %v796 = vpack.c.b16 %v748, %v748
        %v797 = vpack.c.b16 %v749, %v749
        %v798 = vpack.c.b16 %v750, %v750
        %v799 = vpack.c.b16 %v751, %v751
        %v800 = vpack.c.b16 %v752, %v752
        %v801 = vpack.c.b16 %v753, %v753
        %v802 = vpack.c.b16 %v754, %v754
        %v803 = vpack.c.b16 %v755, %v755
        %v804 = vpack.c.b16 %v756, %v756
        %v805 = vpack.c.b16 %v757, %v757
        %v806 = vpack.c.b16 %v758, %v758
        %v807 = vpack.c.b16 %v759, %v759
        %v808 = vpack.c.b16 %v760, %v760
        %v809 = vpack.c.b16 %v761, %v761
        %v810 = vpack.c.b16 %v762, %v762
        %v811 = vpack.c.b16 %v763, %v763
        %v812 = vpack.c.b16 %v764, %v764
        %v813 = vpack.c.b16 %v765, %v765
        %v814 = vpack.c.b16 %v766, %v766
        %v815 = vpack.c.b16 %v767, %v767
        %v816 = vpack.c.b16 %v768, %v768
        %v817 = vpack.c.b16 %v769, %v769
        %v818 = vpack.c.b16 %v770, %v770
        %v819 = vpack.c.b16 %v771, %v771
        %v820 = vpack.c.b16 %v772, %v772
        %v821 = vpack.c.b16 %v773, %v773
        %v822 = vpack.c.b16 %v774, %v774
        %v823 = vpack.c.b16 %v775, %v775
        %v824 = vpack.c.b16 %v776, %v776
        %v825 = vpack.c.b16 %v777, %v777
        %v826 = vpack.c.b16 %v778, %v778
        %v827 = vpack.c.b16 %v779, %v779
        %v828 = vpack.c.b16 %v780, %v780
        %v829 = vpack.c.b16 %v781, %v781
        %v830 = vpack.c.b16 %v782, %v782
        %v831 = vpack.c.b16 %v783, %v783
        %880 = vmatpush.bf16.xpose.msra.mxu0 0
        %881 = vmatpush.bf16.xpose.msra.mxu0 0
        %882 = vmatpush.bf16.xpose.msra.mxu0 0
        %883 = vmatpush.bf16.xpose.msra.mxu0 0
        %884 = vmatpush.bf16.xpose.msra.mxu0 0
        %885 = vmatpush.bf16.xpose.msra.mxu0 0
        %886 = vmatpush.bf16.xpose.msra.mxu0 0
        %887 = vmatpush.bf16.xpose.msra.mxu0 %v784
        %888 = vmatmul.bf16.gmra.mxu0 %v615
        %v889 = vpop.f32.mrf.mxu0
        %v890 = vadd.f32 0.0, %v889
        %v891 = vpop.f32.mrf.mxu0
        %892 = vdwg.mxu0
        %893 = vmatpush.bf16.xpose.msra.mxu0 0
        %894 = vmatpush.bf16.xpose.msra.mxu0 0
        %895 = vmatpush.bf16.xpose.msra.mxu0 0
        %896 = vmatpush.bf16.xpose.msra.mxu0 0
        %897 = vmatpush.bf16.xpose.msra.mxu0 0
        %898 = vmatpush.bf16.xpose.msra.mxu0 0
        %899 = vmatpush.bf16.xpose.msra.mxu0 0
        %900 = vmatpush.bf16.xpose.msra.mxu0 %v785
        %901 = vmatmul.bf16.gmra.mxu0 %v616
        %v902 = vpop.f32.mrf.mxu0
        %v903 = vadd.f32 %v890, %v902
        %v904 = vpop.f32.mrf.mxu0
        %905 = vdwg.mxu0
        %906 = vmatpush.bf16.xpose.msra.mxu0 0
        %907 = vmatpush.bf16.xpose.msra.mxu0 0
        %908 = vmatpush.bf16.xpose.msra.mxu0 0
        %909 = vmatpush.bf16.xpose.msra.mxu0 0
        %910 = vmatpush.bf16.xpose.msra.mxu0 0
        %911 = vmatpush.bf16.xpose.msra.mxu0 0
        %912 = vmatpush.bf16.xpose.msra.mxu0 0
        %913 = vmatpush.bf16.xpose.msra.mxu0 %v786
        %914 = vmatmul.bf16.gmra.mxu0 %v617
        %v915 = vpop.f32.mrf.mxu0
        %v916 = vadd.f32 %v903, %v915
        %v917 = vpop.f32.mrf.mxu0
        %918 = vdwg.mxu0
        %919 = vmatpush.bf16.xpose.msra.mxu0 0
        %920 = vmatpush.bf16.xpose.msra.mxu0 0
        %921 = vmatpush.bf16.xpose.msra.mxu0 0
        %922 = vmatpush.bf16.xpose.msra.mxu0 0
        %923 = vmatpush.bf16.xpose.msra.mxu0 0
        %924 = vmatpush.bf16.xpose.msra.mxu0 0
        %925 = vmatpush.bf16.xpose.msra.mxu0 0
        %926 = vmatpush.bf16.xpose.msra.mxu0 %v787
        %927 = vmatmul.bf16.gmra.mxu0 %v618
        %v928 = vpop.f32.mrf.mxu0
        %v929 = vadd.f32 %v916, %v928
        %v930 = vpop.f32.mrf.mxu0
        %931 = vdwg.mxu0
        %932 = vmatpush.bf16.xpose.msra.mxu0 0
        %933 = vmatpush.bf16.xpose.msra.mxu0 0
        %934 = vmatpush.bf16.xpose.msra.mxu0 0
        %935 = vmatpush.bf16.xpose.msra.mxu0 0
        %936 = vmatpush.bf16.xpose.msra.mxu0 0
        %937 = vmatpush.bf16.xpose.msra.mxu0 0
        %938 = vmatpush.bf16.xpose.msra.mxu0 0
        %939 = vmatpush.bf16.xpose.msra.mxu0 %v788
        %940 = vmatmul.bf16.gmra.mxu0 %v619
        %v941 = vpop.f32.mrf.mxu0
        %v942 = vadd.f32 %v929, %v941
        %v943 = vpop.f32.mrf.mxu0
        %944 = vdwg.mxu0
        %945 = vmatpush.bf16.xpose.msra.mxu0 0
        %946 = vmatpush.bf16.xpose.msra.mxu0 0
        %947 = vmatpush.bf16.xpose.msra.mxu0 0
        %948 = vmatpush.bf16.xpose.msra.mxu0 0
        %949 = vmatpush.bf16.xpose.msra.mxu0 0
        %950 = vmatpush.bf16.xpose.msra.mxu0 0
        %951 = vmatpush.bf16.xpose.msra.mxu0 0
        %952 = vmatpush.bf16.xpose.msra.mxu0 %v789
        %953 = vmatmul.bf16.gmra.mxu0 %v620
        %v954 = vpop.f32.mrf.mxu0
        %v955 = vadd.f32 %v942, %v954
        %v956 = vpop.f32.mrf.mxu0
        %957 = vdwg.mxu0
        %958 = vmatpush.bf16.xpose.msra.mxu0 0
        %959 = vmatpush.bf16.xpose.msra.mxu0 0
        %960 = vmatpush.bf16.xpose.msra.mxu0 0
        %961 = vmatpush.bf16.xpose.msra.mxu0 0
        %962 = vmatpush.bf16.xpose.msra.mxu0 0
        %963 = vmatpush.bf16.xpose.msra.mxu0 0
        %964 = vmatpush.bf16.xpose.msra.mxu0 0
        %965 = vmatpush.bf16.xpose.msra.mxu0 %v790
        %966 = vmatmul.bf16.gmra.mxu0 %v621
        %v967 = vpop.f32.mrf.mxu0
        %v968 = vadd.f32 %v955, %v967
        %v969 = vpop.f32.mrf.mxu0
        %970 = vdwg.mxu0
        %971 = vmatpush.bf16.xpose.msra.mxu0 0
        %972 = vmatpush.bf16.xpose.msra.mxu0 0
        %973 = vmatpush.bf16.xpose.msra.mxu0 0
        %974 = vmatpush.bf16.xpose.msra.mxu0 0
        %975 = vmatpush.bf16.xpose.msra.mxu0 0
        %976 = vmatpush.bf16.xpose.msra.mxu0 0
        %977 = vmatpush.bf16.xpose.msra.mxu0 0
        %978 = vmatpush.bf16.xpose.msra.mxu0 %v791
        %979 = vmatmul.bf16.gmra.mxu0 %v622
        %v980 = vpop.f32.mrf.mxu0
        %v981 = vadd.f32 %v968, %v980
        %v982 = vpop.f32.mrf.mxu0
        %983 = vdwg.mxu0
        %984 = vmatpush.bf16.xpose.msra.mxu0 0
        %985 = vmatpush.bf16.xpose.msra.mxu0 0
        %986 = vmatpush.bf16.xpose.msra.mxu0 0
        %987 = vmatpush.bf16.xpose.msra.mxu0 0
        %988 = vmatpush.bf16.xpose.msra.mxu0 0
        %989 = vmatpush.bf16.xpose.msra.mxu0 0
        %990 = vmatpush.bf16.xpose.msra.mxu0 0
        %991 = vmatpush.bf16.xpose.msra.mxu0 %v792
        %992 = vmatmul.bf16.gmra.mxu0 %v623
        %v993 = vpop.f32.mrf.mxu0
        %v994 = vadd.f32 %v981, %v993
        %v995 = vpop.f32.mrf.mxu0
        %996 = vdwg.mxu0
        %997 = vmatpush.bf16.xpose.msra.mxu0 0
        %998 = vmatpush.bf16.xpose.msra.mxu0 0
        %999 = vmatpush.bf16.xpose.msra.mxu0 0
        %1000 = vmatpush.bf16.xpose.msra.mxu0 0
        %1001 = vmatpush.bf16.xpose.msra.mxu0 0
        %1002 = vmatpush.bf16.xpose.msra.mxu0 0
        %1003 = vmatpush.bf16.xpose.msra.mxu0 0
        %1004 = vmatpush.bf16.xpose.msra.mxu0 %v793
        %1005 = vmatmul.bf16.gmra.mxu0 %v624
        %v1006 = vpop.f32.mrf.mxu0
        %v1007 = vadd.f32 %v994, %v1006
        %v1008 = vpop.f32.mrf.mxu0
        %1009 = vdwg.mxu0
        %1010 = vmatpush.bf16.xpose.msra.mxu0 0
        %1011 = vmatpush.bf16.xpose.msra.mxu0 0
        %1012 = vmatpush.bf16.xpose.msra.mxu0 0
        %1013 = vmatpush.bf16.xpose.msra.mxu0 0
        %1014 = vmatpush.bf16.xpose.msra.mxu0 0
        %1015 = vmatpush.bf16.xpose.msra.mxu0 0
        %1016 = vmatpush.bf16.xpose.msra.mxu0 0
        %1017 = vmatpush.bf16.xpose.msra.mxu0 %v794
        %1018 = vmatmul.bf16.gmra.mxu0 %v625
        %v1019 = vpop.f32.mrf.mxu0
        %v1020 = vadd.f32 %v1007, %v1019
        %v1021 = vpop.f32.mrf.mxu0
        %1022 = vdwg.mxu0
        %1023 = vmatpush.bf16.xpose.msra.mxu0 0
        %1024 = vmatpush.bf16.xpose.msra.mxu0 0
        %1025 = vmatpush.bf16.xpose.msra.mxu0 0
        %1026 = vmatpush.bf16.xpose.msra.mxu0 0
        %1027 = vmatpush.bf16.xpose.msra.mxu0 0
        %1028 = vmatpush.bf16.xpose.msra.mxu0 0
        %1029 = vmatpush.bf16.xpose.msra.mxu0 0
        %1030 = vmatpush.bf16.xpose.msra.mxu0 %v795
        %1031 = vmatmul.bf16.gmra.mxu0 %v626
        %v1032 = vpop.f32.mrf.mxu0
        %v1033 = vadd.f32 %v1020, %v1032
        %v1034 = vpop.f32.mrf.mxu0
        %1035 = vdwg.mxu0
        %1036 = vmatpush.bf16.xpose.msra.mxu0 0
        %1037 = vmatpush.bf16.xpose.msra.mxu0 0
        %1038 = vmatpush.bf16.xpose.msra.mxu0 0
        %1039 = vmatpush.bf16.xpose.msra.mxu0 0
        %1040 = vmatpush.bf16.xpose.msra.mxu0 0
        %1041 = vmatpush.bf16.xpose.msra.mxu0 0
        %1042 = vmatpush.bf16.xpose.msra.mxu0 0
        %1043 = vmatpush.bf16.xpose.msra.mxu0 %v796
        %1044 = vmatmul.bf16.gmra.mxu0 %v627
        %v1045 = vpop.f32.mrf.mxu0
        %v1046 = vadd.f32 %v1033, %v1045
        %v1047 = vpop.f32.mrf.mxu0
        %1048 = vdwg.mxu0
        %1049 = vmatpush.bf16.xpose.msra.mxu0 0
        %1050 = vmatpush.bf16.xpose.msra.mxu0 0
        %1051 = vmatpush.bf16.xpose.msra.mxu0 0
        %1052 = vmatpush.bf16.xpose.msra.mxu0 0
        %1053 = vmatpush.bf16.xpose.msra.mxu0 0
        %1054 = vmatpush.bf16.xpose.msra.mxu0 0
        %1055 = vmatpush.bf16.xpose.msra.mxu0 0
        %1056 = vmatpush.bf16.xpose.msra.mxu0 %v797
        %1057 = vmatmul.bf16.gmra.mxu0 %v628
        %v1058 = vpop.f32.mrf.mxu0
        %v1059 = vadd.f32 %v1046, %v1058
        %v1060 = vpop.f32.mrf.mxu0
        %1061 = vdwg.mxu0
        %1062 = vmatpush.bf16.xpose.msra.mxu0 0
        %1063 = vmatpush.bf16.xpose.msra.mxu0 0
        %1064 = vmatpush.bf16.xpose.msra.mxu0 0
        %1065 = vmatpush.bf16.xpose.msra.mxu0 0
        %1066 = vmatpush.bf16.xpose.msra.mxu0 0
        %1067 = vmatpush.bf16.xpose.msra.mxu0 0
        %1068 = vmatpush.bf16.xpose.msra.mxu0 0
        %1069 = vmatpush.bf16.xpose.msra.mxu0 %v798
        %1070 = vmatmul.bf16.gmra.mxu0 %v629
        %v1071 = vpop.f32.mrf.mxu0
        %v1072 = vadd.f32 %v1059, %v1071
        %v1073 = vpop.f32.mrf.mxu0
        %1074 = vdwg.mxu0
        %1075 = vmatpush.bf16.xpose.msra.mxu0 0
        %1076 = vmatpush.bf16.xpose.msra.mxu0 0
        %1077 = vmatpush.bf16.xpose.msra.mxu0 0
        %1078 = vmatpush.bf16.xpose.msra.mxu0 0
        %1079 = vmatpush.bf16.xpose.msra.mxu0 0
        %1080 = vmatpush.bf16.xpose.msra.mxu0 0
        %1081 = vmatpush.bf16.xpose.msra.mxu0 0
        %1082 = vmatpush.bf16.xpose.msra.mxu0 %v799
        %1083 = vmatmul.bf16.gmra.mxu0 %v630
        %v1084 = vpop.f32.mrf.mxu0
        %v1085 = vadd.f32 %v1072, %v1084
        %v1086 = vpop.f32.mrf.mxu0
        %1087 = vdwg.mxu0
        %1088 = vmatpush.bf16.xpose.msra.mxu0 0
        %1089 = vmatpush.bf16.xpose.msra.mxu0 0
        %1090 = vmatpush.bf16.xpose.msra.mxu0 0
        %1091 = vmatpush.bf16.xpose.msra.mxu0 0
        %1092 = vmatpush.bf16.xpose.msra.mxu0 0
        %1093 = vmatpush.bf16.xpose.msra.mxu0 0
        %1094 = vmatpush.bf16.xpose.msra.mxu0 0
        %1095 = vmatpush.bf16.xpose.msra.mxu0 %v800
        %1096 = vmatmul.bf16.gmra.mxu0 %v631
        %v1097 = vpop.f32.mrf.mxu0
        %v1098 = vadd.f32 %v1085, %v1097
        %v1099 = vpop.f32.mrf.mxu0
        %1100 = vdwg.mxu0
        %1101 = vmatpush.bf16.xpose.msra.mxu0 0
        %1102 = vmatpush.bf16.xpose.msra.mxu0 0
        %1103 = vmatpush.bf16.xpose.msra.mxu0 0
        %1104 = vmatpush.bf16.xpose.msra.mxu0 0
        %1105 = vmatpush.bf16.xpose.msra.mxu0 0
        %1106 = vmatpush.bf16.xpose.msra.mxu0 0
        %1107 = vmatpush.bf16.xpose.msra.mxu0 0
        %1108 = vmatpush.bf16.xpose.msra.mxu0 %v801
        %1109 = vmatmul.bf16.gmra.mxu0 %v632
        %v1110 = vpop.f32.mrf.mxu0
        %v1111 = vadd.f32 %v1098, %v1110
        %v1112 = vpop.f32.mrf.mxu0
        %1113 = vdwg.mxu0
        %1114 = vmatpush.bf16.xpose.msra.mxu0 0
        %1115 = vmatpush.bf16.xpose.msra.mxu0 0
        %1116 = vmatpush.bf16.xpose.msra.mxu0 0
        %1117 = vmatpush.bf16.xpose.msra.mxu0 0
        %1118 = vmatpush.bf16.xpose.msra.mxu0 0
        %1119 = vmatpush.bf16.xpose.msra.mxu0 0
        %1120 = vmatpush.bf16.xpose.msra.mxu0 0
        %1121 = vmatpush.bf16.xpose.msra.mxu0 %v802
        %1122 = vmatmul.bf16.gmra.mxu0 %v633
        %v1123 = vpop.f32.mrf.mxu0
        %v1124 = vadd.f32 %v1111, %v1123
        %v1125 = vpop.f32.mrf.mxu0
        %1126 = vdwg.mxu0
        %1127 = vmatpush.bf16.xpose.msra.mxu0 0
        %1128 = vmatpush.bf16.xpose.msra.mxu0 0
        %1129 = vmatpush.bf16.xpose.msra.mxu0 0
        %1130 = vmatpush.bf16.xpose.msra.mxu0 0
        %1131 = vmatpush.bf16.xpose.msra.mxu0 0
        %1132 = vmatpush.bf16.xpose.msra.mxu0 0
        %1133 = vmatpush.bf16.xpose.msra.mxu0 0
        %1134 = vmatpush.bf16.xpose.msra.mxu0 %v803
        %1135 = vmatmul.bf16.gmra.mxu0 %v634
        %v1136 = vpop.f32.mrf.mxu0
        %v1137 = vadd.f32 %v1124, %v1136
        %v1138 = vpop.f32.mrf.mxu0
        %1139 = vdwg.mxu0
        %1140 = vmatpush.bf16.xpose.msra.mxu0 0
        %1141 = vmatpush.bf16.xpose.msra.mxu0 0
        %1142 = vmatpush.bf16.xpose.msra.mxu0 0
        %1143 = vmatpush.bf16.xpose.msra.mxu0 0
        %1144 = vmatpush.bf16.xpose.msra.mxu0 0
        %1145 = vmatpush.bf16.xpose.msra.mxu0 0
        %1146 = vmatpush.bf16.xpose.msra.mxu0 0
        %1147 = vmatpush.bf16.xpose.msra.mxu0 %v804
        %1148 = vmatmul.bf16.gmra.mxu0 %v635
        %v1149 = vpop.f32.mrf.mxu0
        %v1150 = vadd.f32 %v1137, %v1149
        %v1151 = vpop.f32.mrf.mxu0
        %1152 = vdwg.mxu0
        %1153 = vmatpush.bf16.xpose.msra.mxu0 0
        %1154 = vmatpush.bf16.xpose.msra.mxu0 0
        %1155 = vmatpush.bf16.xpose.msra.mxu0 0
        %1156 = vmatpush.bf16.xpose.msra.mxu0 0
        %1157 = vmatpush.bf16.xpose.msra.mxu0 0
        %1158 = vmatpush.bf16.xpose.msra.mxu0 0
        %1159 = vmatpush.bf16.xpose.msra.mxu0 0
        %1160 = vmatpush.bf16.xpose.msra.mxu0 %v805
        %1161 = vmatmul.bf16.gmra.mxu0 %v636
        %v1162 = vpop.f32.mrf.mxu0
        %v1163 = vadd.f32 %v1150, %v1162
        %v1164 = vpop.f32.mrf.mxu0
        %1165 = vdwg.mxu0
        %1166 = vmatpush.bf16.xpose.msra.mxu0 0
        %1167 = vmatpush.bf16.xpose.msra.mxu0 0
        %1168 = vmatpush.bf16.xpose.msra.mxu0 0
        %1169 = vmatpush.bf16.xpose.msra.mxu0 0
        %1170 = vmatpush.bf16.xpose.msra.mxu0 0
        %1171 = vmatpush.bf16.xpose.msra.mxu0 0
        %1172 = vmatpush.bf16.xpose.msra.mxu0 0
        %1173 = vmatpush.bf16.xpose.msra.mxu0 %v806
        %1174 = vmatmul.bf16.gmra.mxu0 %v637
        %v1175 = vpop.f32.mrf.mxu0
        %v1176 = vadd.f32 %v1163, %v1175
        %v1177 = vpop.f32.mrf.mxu0
        %1178 = vdwg.mxu0
        %1179 = vmatpush.bf16.xpose.msra.mxu0 0
        %1180 = vmatpush.bf16.xpose.msra.mxu0 0
        %1181 = vmatpush.bf16.xpose.msra.mxu0 0
        %1182 = vmatpush.bf16.xpose.msra.mxu0 0
        %1183 = vmatpush.bf16.xpose.msra.mxu0 0
        %1184 = vmatpush.bf16.xpose.msra.mxu0 0
        %1185 = vmatpush.bf16.xpose.msra.mxu0 0
        %1186 = vmatpush.bf16.xpose.msra.mxu0 %v807
        %1187 = vmatmul.bf16.gmra.mxu0 %v638
        %v1188 = vpop.f32.mrf.mxu0
        %v1189 = vadd.f32 %v1176, %v1188
        %v1190 = vpop.f32.mrf.mxu0
        %1191 = vdwg.mxu0
        %1192 = vmatpush.bf16.xpose.msra.mxu0 0
        %1193 = vmatpush.bf16.xpose.msra.mxu0 0
        %1194 = vmatpush.bf16.xpose.msra.mxu0 0
        %1195 = vmatpush.bf16.xpose.msra.mxu0 0
        %1196 = vmatpush.bf16.xpose.msra.mxu0 0
        %1197 = vmatpush.bf16.xpose.msra.mxu0 0
        %1198 = vmatpush.bf16.xpose.msra.mxu0 0
        %1199 = vmatpush.bf16.xpose.msra.mxu0 %v808
        %1200 = vmatmul.bf16.gmra.mxu0 %v639
        %v1201 = vpop.f32.mrf.mxu0
        %v1202 = vadd.f32 %v1189, %v1201
        %v1203 = vpop.f32.mrf.mxu0
        %1204 = vdwg.mxu0
        %1205 = vmatpush.bf16.xpose.msra.mxu0 0
        %1206 = vmatpush.bf16.xpose.msra.mxu0 0
        %1207 = vmatpush.bf16.xpose.msra.mxu0 0
        %1208 = vmatpush.bf16.xpose.msra.mxu0 0
        %1209 = vmatpush.bf16.xpose.msra.mxu0 0
        %1210 = vmatpush.bf16.xpose.msra.mxu0 0
        %1211 = vmatpush.bf16.xpose.msra.mxu0 0
        %1212 = vmatpush.bf16.xpose.msra.mxu0 %v809
        %1213 = vmatmul.bf16.gmra.mxu0 %v640
        %v1214 = vpop.f32.mrf.mxu0
        %v1215 = vadd.f32 %v1202, %v1214
        %v1216 = vpop.f32.mrf.mxu0
        %1217 = vdwg.mxu0
        %1218 = vmatpush.bf16.xpose.msra.mxu0 0
        %1219 = vmatpush.bf16.xpose.msra.mxu0 0
        %1220 = vmatpush.bf16.xpose.msra.mxu0 0
        %1221 = vmatpush.bf16.xpose.msra.mxu0 0
        %1222 = vmatpush.bf16.xpose.msra.mxu0 0
        %1223 = vmatpush.bf16.xpose.msra.mxu0 0
        %1224 = vmatpush.bf16.xpose.msra.mxu0 0
        %1225 = vmatpush.bf16.xpose.msra.mxu0 %v810
        %1226 = vmatmul.bf16.gmra.mxu0 %v641
        %v1227 = vpop.f32.mrf.mxu0
        %v1228 = vadd.f32 %v1215, %v1227
        %v1229 = vpop.f32.mrf.mxu0
        %1230 = vdwg.mxu0
        %1231 = vmatpush.bf16.xpose.msra.mxu0 0
        %1232 = vmatpush.bf16.xpose.msra.mxu0 0
        %1233 = vmatpush.bf16.xpose.msra.mxu0 0
        %1234 = vmatpush.bf16.xpose.msra.mxu0 0
        %1235 = vmatpush.bf16.xpose.msra.mxu0 0
        %1236 = vmatpush.bf16.xpose.msra.mxu0 0
        %1237 = vmatpush.bf16.xpose.msra.mxu0 0
        %1238 = vmatpush.bf16.xpose.msra.mxu0 %v811
        %1239 = vmatmul.bf16.gmra.mxu0 %v642
        %v1240 = vpop.f32.mrf.mxu0
        %v1241 = vadd.f32 %v1228, %v1240
        %v1242 = vpop.f32.mrf.mxu0
        %1243 = vdwg.mxu0
        %1244 = vmatpush.bf16.xpose.msra.mxu0 0
        %1245 = vmatpush.bf16.xpose.msra.mxu0 0
        %1246 = vmatpush.bf16.xpose.msra.mxu0 0
        %1247 = vmatpush.bf16.xpose.msra.mxu0 0
        %1248 = vmatpush.bf16.xpose.msra.mxu0 0
        %1249 = vmatpush.bf16.xpose.msra.mxu0 0
        %1250 = vmatpush.bf16.xpose.msra.mxu0 0
        %1251 = vmatpush.bf16.xpose.msra.mxu0 %v812
        %1252 = vmatmul.bf16.gmra.mxu0 %v643
        %v1253 = vpop.f32.mrf.mxu0
        %v1254 = vadd.f32 %v1241, %v1253
        %v1255 = vpop.f32.mrf.mxu0
        %1256 = vdwg.mxu0
        %1257 = vmatpush.bf16.xpose.msra.mxu0 0
        %1258 = vmatpush.bf16.xpose.msra.mxu0 0
        %1259 = vmatpush.bf16.xpose.msra.mxu0 0
        %1260 = vmatpush.bf16.xpose.msra.mxu0 0
        %1261 = vmatpush.bf16.xpose.msra.mxu0 0
        %1262 = vmatpush.bf16.xpose.msra.mxu0 0
        %1263 = vmatpush.bf16.xpose.msra.mxu0 0
        %1264 = vmatpush.bf16.xpose.msra.mxu0 %v813
        %1265 = vmatmul.bf16.gmra.mxu0 %v644
        %v1266 = vpop.f32.mrf.mxu0
        %v1267 = vadd.f32 %v1254, %v1266
        %v1268 = vpop.f32.mrf.mxu0
        %1269 = vdwg.mxu0
        %1270 = vmatpush.bf16.xpose.msra.mxu0 0
        %1271 = vmatpush.bf16.xpose.msra.mxu0 0
        %1272 = vmatpush.bf16.xpose.msra.mxu0 0
        %1273 = vmatpush.bf16.xpose.msra.mxu0 0
        %1274 = vmatpush.bf16.xpose.msra.mxu0 0
        %1275 = vmatpush.bf16.xpose.msra.mxu0 0
        %1276 = vmatpush.bf16.xpose.msra.mxu0 0
        %1277 = vmatpush.bf16.xpose.msra.mxu0 %v814
        %1278 = vmatmul.bf16.gmra.mxu0 %v645
        %v1279 = vpop.f32.mrf.mxu0
        %v1280 = vadd.f32 %v1267, %v1279
        %v1281 = vpop.f32.mrf.mxu0
        %1282 = vdwg.mxu0
        %1283 = vmatpush.bf16.xpose.msra.mxu0 0
        %1284 = vmatpush.bf16.xpose.msra.mxu0 0
        %1285 = vmatpush.bf16.xpose.msra.mxu0 0
        %1286 = vmatpush.bf16.xpose.msra.mxu0 0
        %1287 = vmatpush.bf16.xpose.msra.mxu0 0
        %1288 = vmatpush.bf16.xpose.msra.mxu0 0
        %1289 = vmatpush.bf16.xpose.msra.mxu0 0
        %1290 = vmatpush.bf16.xpose.msra.mxu0 %v815
        %1291 = vmatmul.bf16.gmra.mxu0 %v646
        %v1292 = vpop.f32.mrf.mxu0
        %v1293 = vadd.f32 %v1280, %v1292
        %v1294 = vpop.f32.mrf.mxu0
        %1295 = vdwg.mxu0
        %1296 = vmatpush.bf16.xpose.msra.mxu0 0
        %1297 = vmatpush.bf16.xpose.msra.mxu0 0
        %1298 = vmatpush.bf16.xpose.msra.mxu0 0
        %1299 = vmatpush.bf16.xpose.msra.mxu0 0
        %1300 = vmatpush.bf16.xpose.msra.mxu0 0
        %1301 = vmatpush.bf16.xpose.msra.mxu0 0
        %1302 = vmatpush.bf16.xpose.msra.mxu0 0
        %1303 = vmatpush.bf16.xpose.msra.mxu0 %v816
        %1304 = vmatmul.bf16.gmra.mxu0 %v647
        %v1305 = vpop.f32.mrf.mxu0
        %v1306 = vadd.f32 %v1293, %v1305
        %v1307 = vpop.f32.mrf.mxu0
        %1308 = vdwg.mxu0
        %1309 = vmatpush.bf16.xpose.msra.mxu0 0
        %1310 = vmatpush.bf16.xpose.msra.mxu0 0
        %1311 = vmatpush.bf16.xpose.msra.mxu0 0
        %1312 = vmatpush.bf16.xpose.msra.mxu0 0
        %1313 = vmatpush.bf16.xpose.msra.mxu0 0
        %1314 = vmatpush.bf16.xpose.msra.mxu0 0
        %1315 = vmatpush.bf16.xpose.msra.mxu0 0
        %1316 = vmatpush.bf16.xpose.msra.mxu0 %v817
        %1317 = vmatmul.bf16.gmra.mxu0 %v648
        %v1318 = vpop.f32.mrf.mxu0
        %v1319 = vadd.f32 %v1306, %v1318
        %v1320 = vpop.f32.mrf.mxu0
        %1321 = vdwg.mxu0
        %1322 = vmatpush.bf16.xpose.msra.mxu0 0
        %1323 = vmatpush.bf16.xpose.msra.mxu0 0
        %1324 = vmatpush.bf16.xpose.msra.mxu0 0
        %1325 = vmatpush.bf16.xpose.msra.mxu0 0
        %1326 = vmatpush.bf16.xpose.msra.mxu0 0
        %1327 = vmatpush.bf16.xpose.msra.mxu0 0
        %1328 = vmatpush.bf16.xpose.msra.mxu0 0
        %1329 = vmatpush.bf16.xpose.msra.mxu0 %v818
        %1330 = vmatmul.bf16.gmra.mxu0 %v649
        %v1331 = vpop.f32.mrf.mxu0
        %v1332 = vadd.f32 %v1319, %v1331
        %v1333 = vpop.f32.mrf.mxu0
        %1334 = vdwg.mxu0
        %1335 = vmatpush.bf16.xpose.msra.mxu0 0
        %1336 = vmatpush.bf16.xpose.msra.mxu0 0
        %1337 = vmatpush.bf16.xpose.msra.mxu0 0
        %1338 = vmatpush.bf16.xpose.msra.mxu0 0
        %1339 = vmatpush.bf16.xpose.msra.mxu0 0
        %1340 = vmatpush.bf16.xpose.msra.mxu0 0
        %1341 = vmatpush.bf16.xpose.msra.mxu0 0
        %1342 = vmatpush.bf16.xpose.msra.mxu0 %v819
        %1343 = vmatmul.bf16.gmra.mxu0 %v650
        %v1344 = vpop.f32.mrf.mxu0
        %v1345 = vadd.f32 %v1332, %v1344
        %v1346 = vpop.f32.mrf.mxu0
        %1347 = vdwg.mxu0
        %1348 = vmatpush.bf16.xpose.msra.mxu0 0
        %1349 = vmatpush.bf16.xpose.msra.mxu0 0
        %1350 = vmatpush.bf16.xpose.msra.mxu0 0
        %1351 = vmatpush.bf16.xpose.msra.mxu0 0
        %1352 = vmatpush.bf16.xpose.msra.mxu0 0
        %1353 = vmatpush.bf16.xpose.msra.mxu0 0
        %1354 = vmatpush.bf16.xpose.msra.mxu0 0
        %1355 = vmatpush.bf16.xpose.msra.mxu0 %v820
        %1356 = vmatmul.bf16.gmra.mxu0 %v651
        %v1357 = vpop.f32.mrf.mxu0
        %v1358 = vadd.f32 %v1345, %v1357
        %v1359 = vpop.f32.mrf.mxu0
        %1360 = vdwg.mxu0
        %1361 = vmatpush.bf16.xpose.msra.mxu0 0
        %1362 = vmatpush.bf16.xpose.msra.mxu0 0
        %1363 = vmatpush.bf16.xpose.msra.mxu0 0
        %1364 = vmatpush.bf16.xpose.msra.mxu0 0
        %1365 = vmatpush.bf16.xpose.msra.mxu0 0
        %1366 = vmatpush.bf16.xpose.msra.mxu0 0
        %1367 = vmatpush.bf16.xpose.msra.mxu0 0
        %1368 = vmatpush.bf16.xpose.msra.mxu0 %v821
        %1369 = vmatmul.bf16.gmra.mxu0 %v652
        %v1370 = vpop.f32.mrf.mxu0
        %v1371 = vadd.f32 %v1358, %v1370
        %v1372 = vpop.f32.mrf.mxu0
        %1373 = vdwg.mxu0
        %1374 = vmatpush.bf16.xpose.msra.mxu0 0
        %1375 = vmatpush.bf16.xpose.msra.mxu0 0
        %1376 = vmatpush.bf16.xpose.msra.mxu0 0
        %1377 = vmatpush.bf16.xpose.msra.mxu0 0
        %1378 = vmatpush.bf16.xpose.msra.mxu0 0
        %1379 = vmatpush.bf16.xpose.msra.mxu0 0
        %1380 = vmatpush.bf16.xpose.msra.mxu0 0
        %1381 = vmatpush.bf16.xpose.msra.mxu0 %v822
        %1382 = vmatmul.bf16.gmra.mxu0 %v653
        %v1383 = vpop.f32.mrf.mxu0
        %v1384 = vadd.f32 %v1371, %v1383
        %v1385 = vpop.f32.mrf.mxu0
        %1386 = vdwg.mxu0
        %1387 = vmatpush.bf16.xpose.msra.mxu0 0
        %1388 = vmatpush.bf16.xpose.msra.mxu0 0
        %1389 = vmatpush.bf16.xpose.msra.mxu0 0
        %1390 = vmatpush.bf16.xpose.msra.mxu0 0
        %1391 = vmatpush.bf16.xpose.msra.mxu0 0
        %1392 = vmatpush.bf16.xpose.msra.mxu0 0
        %1393 = vmatpush.bf16.xpose.msra.mxu0 0
        %1394 = vmatpush.bf16.xpose.msra.mxu0 %v823
        %1395 = vmatmul.bf16.gmra.mxu0 %v654
        %v1396 = vpop.f32.mrf.mxu0
        %v1397 = vadd.f32 %v1384, %v1396
        %v1398 = vpop.f32.mrf.mxu0
        %1399 = vdwg.mxu0
        %1400 = vmatpush.bf16.xpose.msra.mxu0 0
        %1401 = vmatpush.bf16.xpose.msra.mxu0 0
        %1402 = vmatpush.bf16.xpose.msra.mxu0 0
        %1403 = vmatpush.bf16.xpose.msra.mxu0 0
        %1404 = vmatpush.bf16.xpose.msra.mxu0 0
        %1405 = vmatpush.bf16.xpose.msra.mxu0 0
        %1406 = vmatpush.bf16.xpose.msra.mxu0 0
        %1407 = vmatpush.bf16.xpose.msra.mxu0 %v824
        %1408 = vmatmul.bf16.gmra.mxu0 %v655
        %v1409 = vpop.f32.mrf.mxu0
        %v1410 = vadd.f32 %v1397, %v1409
        %v1411 = vpop.f32.mrf.mxu0
        %1412 = vdwg.mxu0
        %1413 = vmatpush.bf16.xpose.msra.mxu0 0
        %1414 = vmatpush.bf16.xpose.msra.mxu0 0
        %1415 = vmatpush.bf16.xpose.msra.mxu0 0
        %1416 = vmatpush.bf16.xpose.msra.mxu0 0
        %1417 = vmatpush.bf16.xpose.msra.mxu0 0
        %1418 = vmatpush.bf16.xpose.msra.mxu0 0
        %1419 = vmatpush.bf16.xpose.msra.mxu0 0
        %1420 = vmatpush.bf16.xpose.msra.mxu0 %v825
        %1421 = vmatmul.bf16.gmra.mxu0 %v656
        %v1422 = vpop.f32.mrf.mxu0
        %v1423 = vadd.f32 %v1410, %v1422
        %v1424 = vpop.f32.mrf.mxu0
        %1425 = vdwg.mxu0
        %1426 = vmatpush.bf16.xpose.msra.mxu0 0
        %1427 = vmatpush.bf16.xpose.msra.mxu0 0
        %1428 = vmatpush.bf16.xpose.msra.mxu0 0
        %1429 = vmatpush.bf16.xpose.msra.mxu0 0
        %1430 = vmatpush.bf16.xpose.msra.mxu0 0
        %1431 = vmatpush.bf16.xpose.msra.mxu0 0
        %1432 = vmatpush.bf16.xpose.msra.mxu0 0
        %1433 = vmatpush.bf16.xpose.msra.mxu0 %v826
        %1434 = vmatmul.bf16.gmra.mxu0 %v657
        %v1435 = vpop.f32.mrf.mxu0
        %v1436 = vadd.f32 %v1423, %v1435
        %v1437 = vpop.f32.mrf.mxu0
        %1438 = vdwg.mxu0
        %1439 = vmatpush.bf16.xpose.msra.mxu0 0
        %1440 = vmatpush.bf16.xpose.msra.mxu0 0
        %1441 = vmatpush.bf16.xpose.msra.mxu0 0
        %1442 = vmatpush.bf16.xpose.msra.mxu0 0
        %1443 = vmatpush.bf16.xpose.msra.mxu0 0
        %1444 = vmatpush.bf16.xpose.msra.mxu0 0
        %1445 = vmatpush.bf16.xpose.msra.mxu0 0
        %1446 = vmatpush.bf16.xpose.msra.mxu0 %v827
        %1447 = vmatmul.bf16.gmra.mxu0 %v658
        %v1448 = vpop.f32.mrf.mxu0
        %v1449 = vadd.f32 %v1436, %v1448
        %v1450 = vpop.f32.mrf.mxu0
        %1451 = vdwg.mxu0
        %1452 = vmatpush.bf16.xpose.msra.mxu0 0
        %1453 = vmatpush.bf16.xpose.msra.mxu0 0
        %1454 = vmatpush.bf16.xpose.msra.mxu0 0
        %1455 = vmatpush.bf16.xpose.msra.mxu0 0
        %1456 = vmatpush.bf16.xpose.msra.mxu0 0
        %1457 = vmatpush.bf16.xpose.msra.mxu0 0
        %1458 = vmatpush.bf16.xpose.msra.mxu0 0
        %1459 = vmatpush.bf16.xpose.msra.mxu0 %v828
        %1460 = vmatmul.bf16.gmra.mxu0 %v659
        %v1461 = vpop.f32.mrf.mxu0
        %v1462 = vadd.f32 %v1449, %v1461
        %v1463 = vpop.f32.mrf.mxu0
        %1464 = vdwg.mxu0
        %1465 = vmatpush.bf16.xpose.msra.mxu0 0
        %1466 = vmatpush.bf16.xpose.msra.mxu0 0
        %1467 = vmatpush.bf16.xpose.msra.mxu0 0
        %1468 = vmatpush.bf16.xpose.msra.mxu0 0
        %1469 = vmatpush.bf16.xpose.msra.mxu0 0
        %1470 = vmatpush.bf16.xpose.msra.mxu0 0
        %1471 = vmatpush.bf16.xpose.msra.mxu0 0
        %1472 = vmatpush.bf16.xpose.msra.mxu0 %v829
        %1473 = vmatmul.bf16.gmra.mxu0 %v660
        %v1474 = vpop.f32.mrf.mxu0
        %v1475 = vadd.f32 %v1462, %v1474
        %v1476 = vpop.f32.mrf.mxu0
        %1477 = vdwg.mxu0
        %1478 = vmatpush.bf16.xpose.msra.mxu0 0
        %1479 = vmatpush.bf16.xpose.msra.mxu0 0
        %1480 = vmatpush.bf16.xpose.msra.mxu0 0
        %1481 = vmatpush.bf16.xpose.msra.mxu0 0
        %1482 = vmatpush.bf16.xpose.msra.mxu0 0
        %1483 = vmatpush.bf16.xpose.msra.mxu0 0
        %1484 = vmatpush.bf16.xpose.msra.mxu0 0
        %1485 = vmatpush.bf16.xpose.msra.mxu0 %v830
        %1486 = vmatmul.bf16.gmra.mxu0 %v661
        %v1487 = vpop.f32.mrf.mxu0
        %v1488 = vadd.f32 %v1475, %v1487
        %v1489 = vpop.f32.mrf.mxu0
        %1490 = vdwg.mxu0
        %1491 = vmatpush.bf16.xpose.msra.mxu0 0
        %1492 = vmatpush.bf16.xpose.msra.mxu0 0
        %1493 = vmatpush.bf16.xpose.msra.mxu0 0
        %1494 = vmatpush.bf16.xpose.msra.mxu0 0
        %1495 = vmatpush.bf16.xpose.msra.mxu0 0
        %1496 = vmatpush.bf16.xpose.msra.mxu0 0
        %1497 = vmatpush.bf16.xpose.msra.mxu0 0
        %1498 = vmatpush.bf16.xpose.msra.mxu0 %v831
        %1499 = vmatmul.bf16.gmra.mxu0 %v662
        %v1500 = vpop.f32.mrf.mxu0
        %v1501 = vadd.f32 %v1488, %v1500
        %v1502 = vpop.f32.mrf.mxu0
        %1503 = vdwg.mxu0
        %v1528 = vunpack.c.l.b16 %v664
        %v1529 = vunpack.c.h.b16 %v664
        %v1530 = vunpack.c.l.b16 %v665
        %v1531 = vunpack.c.h.b16 %v665
        %v1532 = vunpack.c.l.b16 %v666
        %v1533 = vunpack.c.h.b16 %v666
        %v1534 = vunpack.c.l.b16 %v667
        %v1535 = vunpack.c.h.b16 %v667
        %v1536 = vunpack.c.l.b16 %v668
        %v1537 = vunpack.c.h.b16 %v668
        %v1538 = vunpack.c.l.b16 %v669
        %v1539 = vunpack.c.h.b16 %v669
        %v1540 = vunpack.c.l.b16 %v670
        %v1541 = vunpack.c.h.b16 %v670
        %v1542 = vunpack.c.l.b16 %v671
        %v1543 = vunpack.c.h.b16 %v671
        %v1544 = vunpack.c.l.b16 %v672
        %v1545 = vunpack.c.h.b16 %v672
        %v1546 = vunpack.c.l.b16 %v673
        %v1547 = vunpack.c.h.b16 %v673
        %v1548 = vunpack.c.l.b16 %v674
        %v1549 = vunpack.c.h.b16 %v674
        %v1550 = vunpack.c.l.b16 %v675
        %v1551 = vunpack.c.h.b16 %v675
        %v1552 = vunpack.c.l.b16 %v676
        %v1553 = vunpack.c.h.b16 %v676
        %v1554 = vunpack.c.l.b16 %v677
        %v1555 = vunpack.c.h.b16 %v677
        %v1556 = vunpack.c.l.b16 %v678
        %v1557 = vunpack.c.h.b16 %v678
        %v1558 = vunpack.c.l.b16 %v679
        %v1559 = vunpack.c.h.b16 %v679
        %v1560 = vunpack.c.l.b16 %v680
        %v1561 = vunpack.c.h.b16 %v680
        %v1562 = vunpack.c.l.b16 %v681
        %v1563 = vunpack.c.h.b16 %v681
        %v1564 = vunpack.c.l.b16 %v682
        %v1565 = vunpack.c.h.b16 %v682
        %v1566 = vunpack.c.l.b16 %v683
        %v1567 = vunpack.c.h.b16 %v683
        %v1568 = vunpack.c.l.b16 %v684
        %v1569 = vunpack.c.h.b16 %v684
        %v1570 = vunpack.c.l.b16 %v685
        %v1571 = vunpack.c.h.b16 %v685
        %v1572 = vunpack.c.l.b16 %v686
        %v1573 = vunpack.c.h.b16 %v686
        %v1574 = vunpack.c.l.b16 %v687
        %v1575 = vunpack.c.h.b16 %v687
        %v1576 = vpack.c.b16 %v1528, %v1528
        %v1577 = vpack.c.b16 %v1529, %v1529
        %v1578 = vpack.c.b16 %v1530, %v1530
        %v1579 = vpack.c.b16 %v1531, %v1531
        %v1580 = vpack.c.b16 %v1532, %v1532
        %v1581 = vpack.c.b16 %v1533, %v1533
        %v1582 = vpack.c.b16 %v1534, %v1534
        %v1583 = vpack.c.b16 %v1535, %v1535
        %v1584 = vpack.c.b16 %v1536, %v1536
        %v1585 = vpack.c.b16 %v1537, %v1537
        %v1586 = vpack.c.b16 %v1538, %v1538
        %v1587 = vpack.c.b16 %v1539, %v1539
        %v1588 = vpack.c.b16 %v1540, %v1540
        %v1589 = vpack.c.b16 %v1541, %v1541
        %v1590 = vpack.c.b16 %v1542, %v1542
        %v1591 = vpack.c.b16 %v1543, %v1543
        %v1592 = vpack.c.b16 %v1544, %v1544
        %v1593 = vpack.c.b16 %v1545, %v1545
        %v1594 = vpack.c.b16 %v1546, %v1546
        %v1595 = vpack.c.b16 %v1547, %v1547
        %v1596 = vpack.c.b16 %v1548, %v1548
        %v1597 = vpack.c.b16 %v1549, %v1549
        %v1598 = vpack.c.b16 %v1550, %v1550
        %v1599 = vpack.c.b16 %v1551, %v1551
        %v1600 = vpack.c.b16 %v1552, %v1552
        %v1601 = vpack.c.b16 %v1553, %v1553
        %v1602 = vpack.c.b16 %v1554, %v1554
        %v1603 = vpack.c.b16 %v1555, %v1555
        %v1604 = vpack.c.b16 %v1556, %v1556
        %v1605 = vpack.c.b16 %v1557, %v1557
        %v1606 = vpack.c.b16 %v1558, %v1558
        %v1607 = vpack.c.b16 %v1559, %v1559
        %v1608 = vpack.c.b16 %v1560, %v1560
        %v1609 = vpack.c.b16 %v1561, %v1561
        %v1610 = vpack.c.b16 %v1562, %v1562
        %v1611 = vpack.c.b16 %v1563, %v1563
        %v1612 = vpack.c.b16 %v1564, %v1564
        %v1613 = vpack.c.b16 %v1565, %v1565
        %v1614 = vpack.c.b16 %v1566, %v1566
        %v1615 = vpack.c.b16 %v1567, %v1567
        %v1616 = vpack.c.b16 %v1568, %v1568
        %v1617 = vpack.c.b16 %v1569, %v1569
        %v1618 = vpack.c.b16 %v1570, %v1570
        %v1619 = vpack.c.b16 %v1571, %v1571
        %v1620 = vpack.c.b16 %v1572, %v1572
        %v1621 = vpack.c.b16 %v1573, %v1573
        %v1622 = vpack.c.b16 %v1574, %v1574
        %v1623 = vpack.c.b16 %v1575, %v1575
        %1672 = vmatpush.bf16.xpose.msra.mxu0 0
        %1673 = vmatpush.bf16.xpose.msra.mxu0 0
        %1674 = vmatpush.bf16.xpose.msra.mxu0 0
        %1675 = vmatpush.bf16.xpose.msra.mxu0 0
        %1676 = vmatpush.bf16.xpose.msra.mxu0 0
        %1677 = vmatpush.bf16.xpose.msra.mxu0 0
        %1678 = vmatpush.bf16.xpose.msra.mxu0 0
        %1679 = vmatpush.bf16.xpose.msra.mxu0 %v1576
        %1680 = vmatmul.bf16.gmra.mxu0 %v434
        %v1681 = vpop.f32.mrf.mxu0
        %v1682 = vadd.f32 %v1501, %v1681
        %v1683 = vpop.f32.mrf.mxu0
        %1684 = vdwg.mxu0
        %1685 = vmatpush.bf16.xpose.msra.mxu0 0
        %1686 = vmatpush.bf16.xpose.msra.mxu0 0
        %1687 = vmatpush.bf16.xpose.msra.mxu0 0
        %1688 = vmatpush.bf16.xpose.msra.mxu0 0
        %1689 = vmatpush.bf16.xpose.msra.mxu0 0
        %1690 = vmatpush.bf16.xpose.msra.mxu0 0
        %1691 = vmatpush.bf16.xpose.msra.mxu0 0
        %1692 = vmatpush.bf16.xpose.msra.mxu0 %v1577
        %1693 = vmatmul.bf16.gmra.mxu0 %v435
        %v1694 = vpop.f32.mrf.mxu0
        %v1695 = vadd.f32 %v1682, %v1694
        %v1696 = vpop.f32.mrf.mxu0
        %1697 = vdwg.mxu0
        %1698 = vmatpush.bf16.xpose.msra.mxu0 0
        %1699 = vmatpush.bf16.xpose.msra.mxu0 0
        %1700 = vmatpush.bf16.xpose.msra.mxu0 0
        %1701 = vmatpush.bf16.xpose.msra.mxu0 0
        %1702 = vmatpush.bf16.xpose.msra.mxu0 0
        %1703 = vmatpush.bf16.xpose.msra.mxu0 0
        %1704 = vmatpush.bf16.xpose.msra.mxu0 0
        %1705 = vmatpush.bf16.xpose.msra.mxu0 %v1578
        %1706 = vmatmul.bf16.gmra.mxu0 %v436
        %v1707 = vpop.f32.mrf.mxu0
        %v1708 = vadd.f32 %v1695, %v1707
        %v1709 = vpop.f32.mrf.mxu0
        %1710 = vdwg.mxu0
        %1711 = vmatpush.bf16.xpose.msra.mxu0 0
        %1712 = vmatpush.bf16.xpose.msra.mxu0 0
        %1713 = vmatpush.bf16.xpose.msra.mxu0 0
        %1714 = vmatpush.bf16.xpose.msra.mxu0 0
        %1715 = vmatpush.bf16.xpose.msra.mxu0 0
        %1716 = vmatpush.bf16.xpose.msra.mxu0 0
        %1717 = vmatpush.bf16.xpose.msra.mxu0 0
        %1718 = vmatpush.bf16.xpose.msra.mxu0 %v1579
        %1719 = vmatmul.bf16.gmra.mxu0 %v437
        %v1720 = vpop.f32.mrf.mxu0
        %v1721 = vadd.f32 %v1708, %v1720
        %v1722 = vpop.f32.mrf.mxu0
        %1723 = vdwg.mxu0
        %1724 = vmatpush.bf16.xpose.msra.mxu0 0
        %1725 = vmatpush.bf16.xpose.msra.mxu0 0
        %1726 = vmatpush.bf16.xpose.msra.mxu0 0
        %1727 = vmatpush.bf16.xpose.msra.mxu0 0
        %1728 = vmatpush.bf16.xpose.msra.mxu0 0
        %1729 = vmatpush.bf16.xpose.msra.mxu0 0
        %1730 = vmatpush.bf16.xpose.msra.mxu0 0
        %1731 = vmatpush.bf16.xpose.msra.mxu0 %v1580
        %1732 = vmatmul.bf16.gmra.mxu0 %v438
        %v1733 = vpop.f32.mrf.mxu0
        %v1734 = vadd.f32 %v1721, %v1733
        %v1735 = vpop.f32.mrf.mxu0
        %1736 = vdwg.mxu0
        %1737 = vmatpush.bf16.xpose.msra.mxu0 0
        %1738 = vmatpush.bf16.xpose.msra.mxu0 0
        %1739 = vmatpush.bf16.xpose.msra.mxu0 0
        %1740 = vmatpush.bf16.xpose.msra.mxu0 0
        %1741 = vmatpush.bf16.xpose.msra.mxu0 0
        %1742 = vmatpush.bf16.xpose.msra.mxu0 0
        %1743 = vmatpush.bf16.xpose.msra.mxu0 0
        %1744 = vmatpush.bf16.xpose.msra.mxu0 %v1581
        %1745 = vmatmul.bf16.gmra.mxu0 %v439
        %v1746 = vpop.f32.mrf.mxu0
        %v1747 = vadd.f32 %v1734, %v1746
        %v1748 = vpop.f32.mrf.mxu0
        %1749 = vdwg.mxu0
        %1750 = vmatpush.bf16.xpose.msra.mxu0 0
        %1751 = vmatpush.bf16.xpose.msra.mxu0 0
        %1752 = vmatpush.bf16.xpose.msra.mxu0 0
        %1753 = vmatpush.bf16.xpose.msra.mxu0 0
        %1754 = vmatpush.bf16.xpose.msra.mxu0 0
        %1755 = vmatpush.bf16.xpose.msra.mxu0 0
        %1756 = vmatpush.bf16.xpose.msra.mxu0 0
        %1757 = vmatpush.bf16.xpose.msra.mxu0 %v1582
        %1758 = vmatmul.bf16.gmra.mxu0 %v440
        %v1759 = vpop.f32.mrf.mxu0
        %v1760 = vadd.f32 %v1747, %v1759
        %v1761 = vpop.f32.mrf.mxu0
        %1762 = vdwg.mxu0
        %1763 = vmatpush.bf16.xpose.msra.mxu0 0
        %1764 = vmatpush.bf16.xpose.msra.mxu0 0
        %1765 = vmatpush.bf16.xpose.msra.mxu0 0
        %1766 = vmatpush.bf16.xpose.msra.mxu0 0
        %1767 = vmatpush.bf16.xpose.msra.mxu0 0
        %1768 = vmatpush.bf16.xpose.msra.mxu0 0
        %1769 = vmatpush.bf16.xpose.msra.mxu0 0
        %1770 = vmatpush.bf16.xpose.msra.mxu0 %v1583
        %1771 = vmatmul.bf16.gmra.mxu0 %v441
        %v1772 = vpop.f32.mrf.mxu0
        %v1773 = vadd.f32 %v1760, %v1772
        %v1774 = vpop.f32.mrf.mxu0
        %1775 = vdwg.mxu0
        %1776 = vmatpush.bf16.xpose.msra.mxu0 0
        %1777 = vmatpush.bf16.xpose.msra.mxu0 0
        %1778 = vmatpush.bf16.xpose.msra.mxu0 0
        %1779 = vmatpush.bf16.xpose.msra.mxu0 0
        %1780 = vmatpush.bf16.xpose.msra.mxu0 0
        %1781 = vmatpush.bf16.xpose.msra.mxu0 0
        %1782 = vmatpush.bf16.xpose.msra.mxu0 0
        %1783 = vmatpush.bf16.xpose.msra.mxu0 %v1584
        %1784 = vmatmul.bf16.gmra.mxu0 %v442
        %v1785 = vpop.f32.mrf.mxu0
        %v1786 = vadd.f32 %v1773, %v1785
        %v1787 = vpop.f32.mrf.mxu0
        %1788 = vdwg.mxu0
        %1789 = vmatpush.bf16.xpose.msra.mxu0 0
        %1790 = vmatpush.bf16.xpose.msra.mxu0 0
        %1791 = vmatpush.bf16.xpose.msra.mxu0 0
        %1792 = vmatpush.bf16.xpose.msra.mxu0 0
        %1793 = vmatpush.bf16.xpose.msra.mxu0 0
        %1794 = vmatpush.bf16.xpose.msra.mxu0 0
        %1795 = vmatpush.bf16.xpose.msra.mxu0 0
        %1796 = vmatpush.bf16.xpose.msra.mxu0 %v1585
        %1797 = vmatmul.bf16.gmra.mxu0 %v443
        %v1798 = vpop.f32.mrf.mxu0
        %v1799 = vadd.f32 %v1786, %v1798
        %v1800 = vpop.f32.mrf.mxu0
        %1801 = vdwg.mxu0
        %1802 = vmatpush.bf16.xpose.msra.mxu0 0
        %1803 = vmatpush.bf16.xpose.msra.mxu0 0
        %1804 = vmatpush.bf16.xpose.msra.mxu0 0
        %1805 = vmatpush.bf16.xpose.msra.mxu0 0
        %1806 = vmatpush.bf16.xpose.msra.mxu0 0
        %1807 = vmatpush.bf16.xpose.msra.mxu0 0
        %1808 = vmatpush.bf16.xpose.msra.mxu0 0
        %1809 = vmatpush.bf16.xpose.msra.mxu0 %v1586
        %1810 = vmatmul.bf16.gmra.mxu0 %v444
        %v1811 = vpop.f32.mrf.mxu0
        %v1812 = vadd.f32 %v1799, %v1811
        %v1813 = vpop.f32.mrf.mxu0
        %1814 = vdwg.mxu0
        %1815 = vmatpush.bf16.xpose.msra.mxu0 0
        %1816 = vmatpush.bf16.xpose.msra.mxu0 0
        %1817 = vmatpush.bf16.xpose.msra.mxu0 0
        %1818 = vmatpush.bf16.xpose.msra.mxu0 0
        %1819 = vmatpush.bf16.xpose.msra.mxu0 0
        %1820 = vmatpush.bf16.xpose.msra.mxu0 0
        %1821 = vmatpush.bf16.xpose.msra.mxu0 0
        %1822 = vmatpush.bf16.xpose.msra.mxu0 %v1587
        %1823 = vmatmul.bf16.gmra.mxu0 %v445
        %v1824 = vpop.f32.mrf.mxu0
        %v1825 = vadd.f32 %v1812, %v1824
        %v1826 = vpop.f32.mrf.mxu0
        %1827 = vdwg.mxu0
        %1828 = vmatpush.bf16.xpose.msra.mxu0 0
        %1829 = vmatpush.bf16.xpose.msra.mxu0 0
        %1830 = vmatpush.bf16.xpose.msra.mxu0 0
        %1831 = vmatpush.bf16.xpose.msra.mxu0 0
        %1832 = vmatpush.bf16.xpose.msra.mxu0 0
        %1833 = vmatpush.bf16.xpose.msra.mxu0 0
        %1834 = vmatpush.bf16.xpose.msra.mxu0 0
        %1835 = vmatpush.bf16.xpose.msra.mxu0 %v1588
        %1836 = vmatmul.bf16.gmra.mxu0 %v446
        %v1837 = vpop.f32.mrf.mxu0
        %v1838 = vadd.f32 %v1825, %v1837
        %v1839 = vpop.f32.mrf.mxu0
        %1840 = vdwg.mxu0
        %1841 = vmatpush.bf16.xpose.msra.mxu0 0
        %1842 = vmatpush.bf16.xpose.msra.mxu0 0
        %1843 = vmatpush.bf16.xpose.msra.mxu0 0
        %1844 = vmatpush.bf16.xpose.msra.mxu0 0
        %1845 = vmatpush.bf16.xpose.msra.mxu0 0
        %1846 = vmatpush.bf16.xpose.msra.mxu0 0
        %1847 = vmatpush.bf16.xpose.msra.mxu0 0
        %1848 = vmatpush.bf16.xpose.msra.mxu0 %v1589
        %1849 = vmatmul.bf16.gmra.mxu0 %v447
        %v1850 = vpop.f32.mrf.mxu0
        %v1851 = vadd.f32 %v1838, %v1850
        %v1852 = vpop.f32.mrf.mxu0
        %1853 = vdwg.mxu0
        %1854 = vmatpush.bf16.xpose.msra.mxu0 0
        %1855 = vmatpush.bf16.xpose.msra.mxu0 0
        %1856 = vmatpush.bf16.xpose.msra.mxu0 0
        %1857 = vmatpush.bf16.xpose.msra.mxu0 0
        %1858 = vmatpush.bf16.xpose.msra.mxu0 0
        %1859 = vmatpush.bf16.xpose.msra.mxu0 0
        %1860 = vmatpush.bf16.xpose.msra.mxu0 0
        %1861 = vmatpush.bf16.xpose.msra.mxu0 %v1590
        %1862 = vmatmul.bf16.gmra.mxu0 %v448
        %v1863 = vpop.f32.mrf.mxu0
        %v1864 = vadd.f32 %v1851, %v1863
        %v1865 = vpop.f32.mrf.mxu0
        %1866 = vdwg.mxu0
        %1867 = vmatpush.bf16.xpose.msra.mxu0 0
        %1868 = vmatpush.bf16.xpose.msra.mxu0 0
        %1869 = vmatpush.bf16.xpose.msra.mxu0 0
        %1870 = vmatpush.bf16.xpose.msra.mxu0 0
        %1871 = vmatpush.bf16.xpose.msra.mxu0 0
        %1872 = vmatpush.bf16.xpose.msra.mxu0 0
        %1873 = vmatpush.bf16.xpose.msra.mxu0 0
        %1874 = vmatpush.bf16.xpose.msra.mxu0 %v1591
        %1875 = vmatmul.bf16.gmra.mxu0 %v449
        %v1876 = vpop.f32.mrf.mxu0
        %v1877 = vadd.f32 %v1864, %v1876
        %v1878 = vpop.f32.mrf.mxu0
        %1879 = vdwg.mxu0
        %1880 = vmatpush.bf16.xpose.msra.mxu0 0
        %1881 = vmatpush.bf16.xpose.msra.mxu0 0
        %1882 = vmatpush.bf16.xpose.msra.mxu0 0
        %1883 = vmatpush.bf16.xpose.msra.mxu0 0
        %1884 = vmatpush.bf16.xpose.msra.mxu0 0
        %1885 = vmatpush.bf16.xpose.msra.mxu0 0
        %1886 = vmatpush.bf16.xpose.msra.mxu0 0
        %1887 = vmatpush.bf16.xpose.msra.mxu0 %v1592
        %1888 = vmatmul.bf16.gmra.mxu0 %v450
        %v1889 = vpop.f32.mrf.mxu0
        %v1890 = vadd.f32 %v1877, %v1889
        %v1891 = vpop.f32.mrf.mxu0
        %1892 = vdwg.mxu0
        %1893 = vmatpush.bf16.xpose.msra.mxu0 0
        %1894 = vmatpush.bf16.xpose.msra.mxu0 0
        %1895 = vmatpush.bf16.xpose.msra.mxu0 0
        %1896 = vmatpush.bf16.xpose.msra.mxu0 0
        %1897 = vmatpush.bf16.xpose.msra.mxu0 0
        %1898 = vmatpush.bf16.xpose.msra.mxu0 0
        %1899 = vmatpush.bf16.xpose.msra.mxu0 0
        %1900 = vmatpush.bf16.xpose.msra.mxu0 %v1593
        %1901 = vmatmul.bf16.gmra.mxu0 %v451
        %v1902 = vpop.f32.mrf.mxu0
        %v1903 = vadd.f32 %v1890, %v1902
        %v1904 = vpop.f32.mrf.mxu0
        %1905 = vdwg.mxu0
        %1906 = vmatpush.bf16.xpose.msra.mxu0 0
        %1907 = vmatpush.bf16.xpose.msra.mxu0 0
        %1908 = vmatpush.bf16.xpose.msra.mxu0 0
        %1909 = vmatpush.bf16.xpose.msra.mxu0 0
        %1910 = vmatpush.bf16.xpose.msra.mxu0 0
        %1911 = vmatpush.bf16.xpose.msra.mxu0 0
        %1912 = vmatpush.bf16.xpose.msra.mxu0 0
        %1913 = vmatpush.bf16.xpose.msra.mxu0 %v1594
        %1914 = vmatmul.bf16.gmra.mxu0 %v452
        %v1915 = vpop.f32.mrf.mxu0
        %v1916 = vadd.f32 %v1903, %v1915
        %v1917 = vpop.f32.mrf.mxu0
        %1918 = vdwg.mxu0
        %1919 = vmatpush.bf16.xpose.msra.mxu0 0
        %1920 = vmatpush.bf16.xpose.msra.mxu0 0
        %1921 = vmatpush.bf16.xpose.msra.mxu0 0
        %1922 = vmatpush.bf16.xpose.msra.mxu0 0
        %1923 = vmatpush.bf16.xpose.msra.mxu0 0
        %1924 = vmatpush.bf16.xpose.msra.mxu0 0
        %1925 = vmatpush.bf16.xpose.msra.mxu0 0
        %1926 = vmatpush.bf16.xpose.msra.mxu0 %v1595
        %1927 = vmatmul.bf16.gmra.mxu0 %v453
        %v1928 = vpop.f32.mrf.mxu0
        %v1929 = vadd.f32 %v1916, %v1928
        %v1930 = vpop.f32.mrf.mxu0
        %1931 = vdwg.mxu0
        %1932 = vmatpush.bf16.xpose.msra.mxu0 0
        %1933 = vmatpush.bf16.xpose.msra.mxu0 0
        %1934 = vmatpush.bf16.xpose.msra.mxu0 0
        %1935 = vmatpush.bf16.xpose.msra.mxu0 0
        %1936 = vmatpush.bf16.xpose.msra.mxu0 0
        %1937 = vmatpush.bf16.xpose.msra.mxu0 0
        %1938 = vmatpush.bf16.xpose.msra.mxu0 0
        %1939 = vmatpush.bf16.xpose.msra.mxu0 %v1596
        %1940 = vmatmul.bf16.gmra.mxu0 %v454
        %v1941 = vpop.f32.mrf.mxu0
        %v1942 = vadd.f32 %v1929, %v1941
        %v1943 = vpop.f32.mrf.mxu0
        %1944 = vdwg.mxu0
        %1945 = vmatpush.bf16.xpose.msra.mxu0 0
        %1946 = vmatpush.bf16.xpose.msra.mxu0 0
        %1947 = vmatpush.bf16.xpose.msra.mxu0 0
        %1948 = vmatpush.bf16.xpose.msra.mxu0 0
        %1949 = vmatpush.bf16.xpose.msra.mxu0 0
        %1950 = vmatpush.bf16.xpose.msra.mxu0 0
        %1951 = vmatpush.bf16.xpose.msra.mxu0 0
        %1952 = vmatpush.bf16.xpose.msra.mxu0 %v1597
        %1953 = vmatmul.bf16.gmra.mxu0 %v455
        %v1954 = vpop.f32.mrf.mxu0
        %v1955 = vadd.f32 %v1942, %v1954
        %v1956 = vpop.f32.mrf.mxu0
        %1957 = vdwg.mxu0
        %1958 = vmatpush.bf16.xpose.msra.mxu0 0
        %1959 = vmatpush.bf16.xpose.msra.mxu0 0
        %1960 = vmatpush.bf16.xpose.msra.mxu0 0
        %1961 = vmatpush.bf16.xpose.msra.mxu0 0
        %1962 = vmatpush.bf16.xpose.msra.mxu0 0
        %1963 = vmatpush.bf16.xpose.msra.mxu0 0
        %1964 = vmatpush.bf16.xpose.msra.mxu0 0
        %1965 = vmatpush.bf16.xpose.msra.mxu0 %v1598
        %1966 = vmatmul.bf16.gmra.mxu0 %v456
        %v1967 = vpop.f32.mrf.mxu0
        %v1968 = vadd.f32 %v1955, %v1967
        %v1969 = vpop.f32.mrf.mxu0
        %1970 = vdwg.mxu0
        %1971 = vmatpush.bf16.xpose.msra.mxu0 0
        %1972 = vmatpush.bf16.xpose.msra.mxu0 0
        %1973 = vmatpush.bf16.xpose.msra.mxu0 0
        %1974 = vmatpush.bf16.xpose.msra.mxu0 0
        %1975 = vmatpush.bf16.xpose.msra.mxu0 0
        %1976 = vmatpush.bf16.xpose.msra.mxu0 0
        %1977 = vmatpush.bf16.xpose.msra.mxu0 0
        %1978 = vmatpush.bf16.xpose.msra.mxu0 %v1599
        %1979 = vmatmul.bf16.gmra.mxu0 %v457
        %v1980 = vpop.f32.mrf.mxu0
        %v1981 = vadd.f32 %v1968, %v1980
        %v1982 = vpop.f32.mrf.mxu0
        %1983 = vdwg.mxu0
        %1984 = vmatpush.bf16.xpose.msra.mxu0 0
        %1985 = vmatpush.bf16.xpose.msra.mxu0 0
        %1986 = vmatpush.bf16.xpose.msra.mxu0 0
        %1987 = vmatpush.bf16.xpose.msra.mxu0 0
        %1988 = vmatpush.bf16.xpose.msra.mxu0 0
        %1989 = vmatpush.bf16.xpose.msra.mxu0 0
        %1990 = vmatpush.bf16.xpose.msra.mxu0 0
        %1991 = vmatpush.bf16.xpose.msra.mxu0 %v1600
        %1992 = vmatmul.bf16.gmra.mxu0 %v458
        %v1993 = vpop.f32.mrf.mxu0
        %v1994 = vadd.f32 %v1981, %v1993
        %v1995 = vpop.f32.mrf.mxu0
        %1996 = vdwg.mxu0
        %1997 = vmatpush.bf16.xpose.msra.mxu0 0
        %1998 = vmatpush.bf16.xpose.msra.mxu0 0
        %1999 = vmatpush.bf16.xpose.msra.mxu0 0
        %2000 = vmatpush.bf16.xpose.msra.mxu0 0
        %2001 = vmatpush.bf16.xpose.msra.mxu0 0
        %2002 = vmatpush.bf16.xpose.msra.mxu0 0
        %2003 = vmatpush.bf16.xpose.msra.mxu0 0
        %2004 = vmatpush.bf16.xpose.msra.mxu0 %v1601
        %2005 = vmatmul.bf16.gmra.mxu0 %v459
        %v2006 = vpop.f32.mrf.mxu0
        %v2007 = vadd.f32 %v1994, %v2006
        %v2008 = vpop.f32.mrf.mxu0
        %2009 = vdwg.mxu0
        %2010 = vmatpush.bf16.xpose.msra.mxu0 0
        %2011 = vmatpush.bf16.xpose.msra.mxu0 0
        %2012 = vmatpush.bf16.xpose.msra.mxu0 0
        %2013 = vmatpush.bf16.xpose.msra.mxu0 0
        %2014 = vmatpush.bf16.xpose.msra.mxu0 0
        %2015 = vmatpush.bf16.xpose.msra.mxu0 0
        %2016 = vmatpush.bf16.xpose.msra.mxu0 0
        %2017 = vmatpush.bf16.xpose.msra.mxu0 %v1602
        %2018 = vmatmul.bf16.gmra.mxu0 %v460
        %v2019 = vpop.f32.mrf.mxu0
        %v2020 = vadd.f32 %v2007, %v2019
        %v2021 = vpop.f32.mrf.mxu0
        %2022 = vdwg.mxu0
        %2023 = vmatpush.bf16.xpose.msra.mxu0 0
        %2024 = vmatpush.bf16.xpose.msra.mxu0 0
        %2025 = vmatpush.bf16.xpose.msra.mxu0 0
        %2026 = vmatpush.bf16.xpose.msra.mxu0 0
        %2027 = vmatpush.bf16.xpose.msra.mxu0 0
        %2028 = vmatpush.bf16.xpose.msra.mxu0 0
        %2029 = vmatpush.bf16.xpose.msra.mxu0 0
        %2030 = vmatpush.bf16.xpose.msra.mxu0 %v1603
        %2031 = vmatmul.bf16.gmra.mxu0 %v461
        %v2032 = vpop.f32.mrf.mxu0
        %v2033 = vadd.f32 %v2020, %v2032
        %v2034 = vpop.f32.mrf.mxu0
        %2035 = vdwg.mxu0
        %2036 = vmatpush.bf16.xpose.msra.mxu0 0
        %2037 = vmatpush.bf16.xpose.msra.mxu0 0
        %2038 = vmatpush.bf16.xpose.msra.mxu0 0
        %2039 = vmatpush.bf16.xpose.msra.mxu0 0
        %2040 = vmatpush.bf16.xpose.msra.mxu0 0
        %2041 = vmatpush.bf16.xpose.msra.mxu0 0
        %2042 = vmatpush.bf16.xpose.msra.mxu0 0
        %2043 = vmatpush.bf16.xpose.msra.mxu0 %v1604
        %2044 = vmatmul.bf16.gmra.mxu0 %v462
        %v2045 = vpop.f32.mrf.mxu0
        %v2046 = vadd.f32 %v2033, %v2045
        %v2047 = vpop.f32.mrf.mxu0
        %2048 = vdwg.mxu0
        %2049 = vmatpush.bf16.xpose.msra.mxu0 0
        %2050 = vmatpush.bf16.xpose.msra.mxu0 0
        %2051 = vmatpush.bf16.xpose.msra.mxu0 0
        %2052 = vmatpush.bf16.xpose.msra.mxu0 0
        %2053 = vmatpush.bf16.xpose.msra.mxu0 0
        %2054 = vmatpush.bf16.xpose.msra.mxu0 0
        %2055 = vmatpush.bf16.xpose.msra.mxu0 0
        %2056 = vmatpush.bf16.xpose.msra.mxu0 %v1605
        %2057 = vmatmul.bf16.gmra.mxu0 %v463
        %v2058 = vpop.f32.mrf.mxu0
        %v2059 = vadd.f32 %v2046, %v2058
        %v2060 = vpop.f32.mrf.mxu0
        %2061 = vdwg.mxu0
        %2062 = vmatpush.bf16.xpose.msra.mxu0 0
        %2063 = vmatpush.bf16.xpose.msra.mxu0 0
        %2064 = vmatpush.bf16.xpose.msra.mxu0 0
        %2065 = vmatpush.bf16.xpose.msra.mxu0 0
        %2066 = vmatpush.bf16.xpose.msra.mxu0 0
        %2067 = vmatpush.bf16.xpose.msra.mxu0 0
        %2068 = vmatpush.bf16.xpose.msra.mxu0 0
        %2069 = vmatpush.bf16.xpose.msra.mxu0 %v1606
        %2070 = vmatmul.bf16.gmra.mxu0 %v464
        %v2071 = vpop.f32.mrf.mxu0
        %v2072 = vadd.f32 %v2059, %v2071
        %v2073 = vpop.f32.mrf.mxu0
        %2074 = vdwg.mxu0
        %2075 = vmatpush.bf16.xpose.msra.mxu0 0
        %2076 = vmatpush.bf16.xpose.msra.mxu0 0
        %2077 = vmatpush.bf16.xpose.msra.mxu0 0
        %2078 = vmatpush.bf16.xpose.msra.mxu0 0
        %2079 = vmatpush.bf16.xpose.msra.mxu0 0
        %2080 = vmatpush.bf16.xpose.msra.mxu0 0
        %2081 = vmatpush.bf16.xpose.msra.mxu0 0
        %2082 = vmatpush.bf16.xpose.msra.mxu0 %v1607
        %2083 = vmatmul.bf16.gmra.mxu0 %v465
        %v2084 = vpop.f32.mrf.mxu0
        %v2085 = vadd.f32 %v2072, %v2084
        %v2086 = vpop.f32.mrf.mxu0
        %2087 = vdwg.mxu0
        %2088 = vmatpush.bf16.xpose.msra.mxu0 0
        %2089 = vmatpush.bf16.xpose.msra.mxu0 0
        %2090 = vmatpush.bf16.xpose.msra.mxu0 0
        %2091 = vmatpush.bf16.xpose.msra.mxu0 0
        %2092 = vmatpush.bf16.xpose.msra.mxu0 0
        %2093 = vmatpush.bf16.xpose.msra.mxu0 0
        %2094 = vmatpush.bf16.xpose.msra.mxu0 0
        %2095 = vmatpush.bf16.xpose.msra.mxu0 %v1608
        %2096 = vmatmul.bf16.gmra.mxu0 %v466
        %v2097 = vpop.f32.mrf.mxu0
        %v2098 = vadd.f32 %v2085, %v2097
        %v2099 = vpop.f32.mrf.mxu0
        %2100 = vdwg.mxu0
        %2101 = vmatpush.bf16.xpose.msra.mxu0 0
        %2102 = vmatpush.bf16.xpose.msra.mxu0 0
        %2103 = vmatpush.bf16.xpose.msra.mxu0 0
        %2104 = vmatpush.bf16.xpose.msra.mxu0 0
        %2105 = vmatpush.bf16.xpose.msra.mxu0 0
        %2106 = vmatpush.bf16.xpose.msra.mxu0 0
        %2107 = vmatpush.bf16.xpose.msra.mxu0 0
        %2108 = vmatpush.bf16.xpose.msra.mxu0 %v1609
        %2109 = vmatmul.bf16.gmra.mxu0 %v467
        %v2110 = vpop.f32.mrf.mxu0
        %v2111 = vadd.f32 %v2098, %v2110
        %v2112 = vpop.f32.mrf.mxu0
        %2113 = vdwg.mxu0
        %2114 = vmatpush.bf16.xpose.msra.mxu0 0
        %2115 = vmatpush.bf16.xpose.msra.mxu0 0
        %2116 = vmatpush.bf16.xpose.msra.mxu0 0
        %2117 = vmatpush.bf16.xpose.msra.mxu0 0
        %2118 = vmatpush.bf16.xpose.msra.mxu0 0
        %2119 = vmatpush.bf16.xpose.msra.mxu0 0
        %2120 = vmatpush.bf16.xpose.msra.mxu0 0
        %2121 = vmatpush.bf16.xpose.msra.mxu0 %v1610
        %2122 = vmatmul.bf16.gmra.mxu0 %v468
        %v2123 = vpop.f32.mrf.mxu0
        %v2124 = vadd.f32 %v2111, %v2123
        %v2125 = vpop.f32.mrf.mxu0
        %2126 = vdwg.mxu0
        %2127 = vmatpush.bf16.xpose.msra.mxu0 0
        %2128 = vmatpush.bf16.xpose.msra.mxu0 0
        %2129 = vmatpush.bf16.xpose.msra.mxu0 0
        %2130 = vmatpush.bf16.xpose.msra.mxu0 0
        %2131 = vmatpush.bf16.xpose.msra.mxu0 0
        %2132 = vmatpush.bf16.xpose.msra.mxu0 0
        %2133 = vmatpush.bf16.xpose.msra.mxu0 0
        %2134 = vmatpush.bf16.xpose.msra.mxu0 %v1611
        %2135 = vmatmul.bf16.gmra.mxu0 %v469
        %v2136 = vpop.f32.mrf.mxu0
        %v2137 = vadd.f32 %v2124, %v2136
        %v2138 = vpop.f32.mrf.mxu0
        %2139 = vdwg.mxu0
        %2140 = vmatpush.bf16.xpose.msra.mxu0 0
        %2141 = vmatpush.bf16.xpose.msra.mxu0 0
        %2142 = vmatpush.bf16.xpose.msra.mxu0 0
        %2143 = vmatpush.bf16.xpose.msra.mxu0 0
        %2144 = vmatpush.bf16.xpose.msra.mxu0 0
        %2145 = vmatpush.bf16.xpose.msra.mxu0 0
        %2146 = vmatpush.bf16.xpose.msra.mxu0 0
        %2147 = vmatpush.bf16.xpose.msra.mxu0 %v1612
        %2148 = vmatmul.bf16.gmra.mxu0 %v470
        %v2149 = vpop.f32.mrf.mxu0
        %v2150 = vadd.f32 %v2137, %v2149
        %v2151 = vpop.f32.mrf.mxu0
        %2152 = vdwg.mxu0
        %2153 = vmatpush.bf16.xpose.msra.mxu0 0
        %2154 = vmatpush.bf16.xpose.msra.mxu0 0
        %2155 = vmatpush.bf16.xpose.msra.mxu0 0
        %2156 = vmatpush.bf16.xpose.msra.mxu0 0
        %2157 = vmatpush.bf16.xpose.msra.mxu0 0
        %2158 = vmatpush.bf16.xpose.msra.mxu0 0
        %2159 = vmatpush.bf16.xpose.msra.mxu0 0
        %2160 = vmatpush.bf16.xpose.msra.mxu0 %v1613
        %2161 = vmatmul.bf16.gmra.mxu0 %v471
        %v2162 = vpop.f32.mrf.mxu0
        %v2163 = vadd.f32 %v2150, %v2162
        %v2164 = vpop.f32.mrf.mxu0
        %2165 = vdwg.mxu0
        %2166 = vmatpush.bf16.xpose.msra.mxu0 0
        %2167 = vmatpush.bf16.xpose.msra.mxu0 0
        %2168 = vmatpush.bf16.xpose.msra.mxu0 0
        %2169 = vmatpush.bf16.xpose.msra.mxu0 0
        %2170 = vmatpush.bf16.xpose.msra.mxu0 0
        %2171 = vmatpush.bf16.xpose.msra.mxu0 0
        %2172 = vmatpush.bf16.xpose.msra.mxu0 0
        %2173 = vmatpush.bf16.xpose.msra.mxu0 %v1614
        %2174 = vmatmul.bf16.gmra.mxu0 %v472
        %v2175 = vpop.f32.mrf.mxu0
        %v2176 = vadd.f32 %v2163, %v2175
        %v2177 = vpop.f32.mrf.mxu0
        %2178 = vdwg.mxu0
        %2179 = vmatpush.bf16.xpose.msra.mxu0 0
        %2180 = vmatpush.bf16.xpose.msra.mxu0 0
        %2181 = vmatpush.bf16.xpose.msra.mxu0 0
        %2182 = vmatpush.bf16.xpose.msra.mxu0 0
        %2183 = vmatpush.bf16.xpose.msra.mxu0 0
        %2184 = vmatpush.bf16.xpose.msra.mxu0 0
        %2185 = vmatpush.bf16.xpose.msra.mxu0 0
        %2186 = vmatpush.bf16.xpose.msra.mxu0 %v1615
        %2187 = vmatmul.bf16.gmra.mxu0 %v473
        %v2188 = vpop.f32.mrf.mxu0
        %v2189 = vadd.f32 %v2176, %v2188
        %v2190 = vpop.f32.mrf.mxu0
        %2191 = vdwg.mxu0
        %2192 = vmatpush.bf16.xpose.msra.mxu0 0
        %2193 = vmatpush.bf16.xpose.msra.mxu0 0
        %2194 = vmatpush.bf16.xpose.msra.mxu0 0
        %2195 = vmatpush.bf16.xpose.msra.mxu0 0
        %2196 = vmatpush.bf16.xpose.msra.mxu0 0
        %2197 = vmatpush.bf16.xpose.msra.mxu0 0
        %2198 = vmatpush.bf16.xpose.msra.mxu0 0
        %2199 = vmatpush.bf16.xpose.msra.mxu0 %v1616
        %2200 = vmatmul.bf16.gmra.mxu0 %v474
        %v2201 = vpop.f32.mrf.mxu0
        %v2202 = vadd.f32 %v2189, %v2201
        %v2203 = vpop.f32.mrf.mxu0
        %2204 = vdwg.mxu0
        %2205 = vmatpush.bf16.xpose.msra.mxu0 0
        %2206 = vmatpush.bf16.xpose.msra.mxu0 0
        %2207 = vmatpush.bf16.xpose.msra.mxu0 0
        %2208 = vmatpush.bf16.xpose.msra.mxu0 0
        %2209 = vmatpush.bf16.xpose.msra.mxu0 0
        %2210 = vmatpush.bf16.xpose.msra.mxu0 0
        %2211 = vmatpush.bf16.xpose.msra.mxu0 0
        %2212 = vmatpush.bf16.xpose.msra.mxu0 %v1617
        %2213 = vmatmul.bf16.gmra.mxu0 %v475
        %v2214 = vpop.f32.mrf.mxu0
        %v2215 = vadd.f32 %v2202, %v2214
        %v2216 = vpop.f32.mrf.mxu0
        %2217 = vdwg.mxu0
        %2218 = vmatpush.bf16.xpose.msra.mxu0 0
        %2219 = vmatpush.bf16.xpose.msra.mxu0 0
        %2220 = vmatpush.bf16.xpose.msra.mxu0 0
        %2221 = vmatpush.bf16.xpose.msra.mxu0 0
        %2222 = vmatpush.bf16.xpose.msra.mxu0 0
        %2223 = vmatpush.bf16.xpose.msra.mxu0 0
        %2224 = vmatpush.bf16.xpose.msra.mxu0 0
        %2225 = vmatpush.bf16.xpose.msra.mxu0 %v1618
        %2226 = vmatmul.bf16.gmra.mxu0 %v476
        %v2227 = vpop.f32.mrf.mxu0
        %v2228 = vadd.f32 %v2215, %v2227
        %v2229 = vpop.f32.mrf.mxu0
        %2230 = vdwg.mxu0
        %2231 = vmatpush.bf16.xpose.msra.mxu0 0
        %2232 = vmatpush.bf16.xpose.msra.mxu0 0
        %2233 = vmatpush.bf16.xpose.msra.mxu0 0
        %2234 = vmatpush.bf16.xpose.msra.mxu0 0
        %2235 = vmatpush.bf16.xpose.msra.mxu0 0
        %2236 = vmatpush.bf16.xpose.msra.mxu0 0
        %2237 = vmatpush.bf16.xpose.msra.mxu0 0
        %2238 = vmatpush.bf16.xpose.msra.mxu0 %v1619
        %2239 = vmatmul.bf16.gmra.mxu0 %v477
        %v2240 = vpop.f32.mrf.mxu0
        %v2241 = vadd.f32 %v2228, %v2240
        %v2242 = vpop.f32.mrf.mxu0
        %2243 = vdwg.mxu0
        %2244 = vmatpush.bf16.xpose.msra.mxu0 0
        %2245 = vmatpush.bf16.xpose.msra.mxu0 0
        %2246 = vmatpush.bf16.xpose.msra.mxu0 0
        %2247 = vmatpush.bf16.xpose.msra.mxu0 0
        %2248 = vmatpush.bf16.xpose.msra.mxu0 0
        %2249 = vmatpush.bf16.xpose.msra.mxu0 0
        %2250 = vmatpush.bf16.xpose.msra.mxu0 0
        %2251 = vmatpush.bf16.xpose.msra.mxu0 %v1620
        %2252 = vmatmul.bf16.gmra.mxu0 %v478
        %v2253 = vpop.f32.mrf.mxu0
        %v2254 = vadd.f32 %v2241, %v2253
        %v2255 = vpop.f32.mrf.mxu0
        %2256 = vdwg.mxu0
        %2257 = vmatpush.bf16.xpose.msra.mxu0 0
        %2258 = vmatpush.bf16.xpose.msra.mxu0 0
        %2259 = vmatpush.bf16.xpose.msra.mxu0 0
        %2260 = vmatpush.bf16.xpose.msra.mxu0 0
        %2261 = vmatpush.bf16.xpose.msra.mxu0 0
        %2262 = vmatpush.bf16.xpose.msra.mxu0 0
        %2263 = vmatpush.bf16.xpose.msra.mxu0 0
        %2264 = vmatpush.bf16.xpose.msra.mxu0 %v1621
        %2265 = vmatmul.bf16.gmra.mxu0 %v479
        %v2266 = vpop.f32.mrf.mxu0
        %v2267 = vadd.f32 %v2254, %v2266
        %v2268 = vpop.f32.mrf.mxu0
        %2269 = vdwg.mxu0
        %2270 = vmatpush.bf16.xpose.msra.mxu0 0
        %2271 = vmatpush.bf16.xpose.msra.mxu0 0
        %2272 = vmatpush.bf16.xpose.msra.mxu0 0
        %2273 = vmatpush.bf16.xpose.msra.mxu0 0
        %2274 = vmatpush.bf16.xpose.msra.mxu0 0
        %2275 = vmatpush.bf16.xpose.msra.mxu0 0
        %2276 = vmatpush.bf16.xpose.msra.mxu0 0
        %2277 = vmatpush.bf16.xpose.msra.mxu0 %v1622
        %2278 = vmatmul.bf16.gmra.mxu0 %v480
        %v2279 = vpop.f32.mrf.mxu0
        %v2280 = vadd.f32 %v2267, %v2279
        %v2281 = vpop.f32.mrf.mxu0
        %2282 = vdwg.mxu0
        %2283 = vmatpush.bf16.xpose.msra.mxu0 0
        %2284 = vmatpush.bf16.xpose.msra.mxu0 0
        %2285 = vmatpush.bf16.xpose.msra.mxu0 0
        %2286 = vmatpush.bf16.xpose.msra.mxu0 0
        %2287 = vmatpush.bf16.xpose.msra.mxu0 0
        %2288 = vmatpush.bf16.xpose.msra.mxu0 0
        %2289 = vmatpush.bf16.xpose.msra.mxu0 0
        %2290 = vmatpush.bf16.xpose.msra.mxu0 %v1623
        %2291 = vmatmul.bf16.gmra.mxu0 %v481
        %v2292 = vpop.f32.mrf.mxu0
        %v2293 = vadd.f32 %v2280, %v2292
        %v2294 = vpop.f32.mrf.mxu0
        %2295 = vdwg.mxu0
        %v2296 = vadd.f32 %v663, %v2293
        %vm2297 = vcmask 58368
        %2298 = vst.msk [vmem:[#allocation2] sm:$0x3] %vm2297, %v2296
        %p2299 = scmp.eq.s32.totalorder %s18, 7
        // Predicated region
        $region49: #{cnnf_forward.1} parent=39 // pred_check
          %p2300 = pneg %p2299
        $region50: #{cnnf_forward.1} parent=39 // pred_check_branch
          %2302 = sbr.rel (%p2300) target = $region52
        $region51: #{cnnf_forward.1} parent=39 // pred_region
          %v2303 = vld [vmem:[#allocation2] sm:$0x3]
          %v2304 = vld [vmem:[#allocation3] sm:$0x1]
          %v2306 = vperm.slane %v2304, 0
          %v2308 = vadd.f32 %v2303, %v2306
          %v2309 = vsel %vm2297, %v2308, -inf
          %2310 = vmax.xlane.f32.xlu0 %v2309
          %v2311 = vpop.xlane.xlu0 %2310
          %v2312 = vsub.f32 %v2308, %v2311
          %v2313 = vmul.f32 %v2312, 1.442695
          %v2314 = vpow.pop %v2313
          %v2315 = vsel %vm2297, %v2314, 0.0
          %2316 = vadd.xlane.f32.xlu0 %v2315
          %v2317 = vpop.xlane.xlu0 %2316
          %v2318 = vrcp.pop %v2317
          %v2319 = vmul.f32 %v2317, %v2318
          %v2320 = vsub.f32 1.0, %v2319
          %v2321 = vmul.f32 %v2318, %v2320
          %v2322 = vadd.f32 %v2318, %v2321
          %vm2323 = vweird.f32 %v2317
          %vm2324 = vweird.f32 %v2318
          %vm2325 = vmor %vm2323, %vm2324
          %v2326 = vsel %vm2325, %v2318, %v2322
          %v2327 = vand.u32 2147483647, %v2317
          %vm2328 = vcmp.eq.f32.partialorder %v2327, 8.507059e+37
          %v2329 = vand.u32 %v2317, 2147483648
          %v2330 = vor.u32 1.1754944e-38, %v2329
          %v2331 = vsel %vm2328, %v2330, %v2326
          %v2332 = vmul.f32 %v2314, %v2331
          %vm2333 = vcmask 33792
          %2334 = vst.msk [vmem:[#allocation6] sm:$0x3] %vm2333, %v2332
        $region52: #{cnnf_forward.1} parent=39 // pred_fallthru
          _
        // Predicated region
        $region53: #{cnnf_forward.1} parent=39 // pred_check
          %p2335 = pneg %p156
        $region54: #{cnnf_forward.1} parent=39 // pred_check_branch
          %2337 = sbr.rel (%p2335) target = $region56
        $region55: #{cnnf_forward.1} parent=39 // pred_region
          %2339 = vsyncadd [#allocation5], 0
          %s2341 = sshll.u32 [#allocation6], 4
          %s2342 = int_to_ptr.vmem [resolvable:$true] %s2341
          %s2343 = sshll.u32 %s5, 4
          %s2344 = int_to_ptr.hbm [resolvable:$true] %s2343
          %2346 = dma.vmem_to_hbm [thread:$0]  %s2342, 32, %s2344, [#allocation5]
        $region56: #{cnnf_forward.1} parent=39 // pred_fallthru
          _
        // Predicated region
        $region57: #{cnnf_forward.1} parent=39 // pred_check
          %p2347 = pneg %p156
        $region58: #{cnnf_forward.1} parent=39 // pred_check_branch
          %2349 = sbr.rel (%p2347) target = $region60
        $region59: #{cnnf_forward.1} parent=39 // pred_region
          %2351 = dma.done [#allocation5], 32
        $region60: #{cnnf_forward.1} parent=39 // pred_fallthru
          _
      $region40: #{cnnf_forward.1} parent=5 // pred_fallthru
        _
      %p2352 = scmp.le.s32.totalorder 2, %s13
      // Predicated region
      $region61: #{cnnf_forward.1} parent=5 // pred_check
        %p2353 = pneg %p2352
      $region62: #{cnnf_forward.1} parent=5 // pred_check_branch
        %2355 = sbr.rel (%p2353) target = $region64
      $region63: #{cnnf_forward.1} parent=5 // pred_region
        %s2356 = ssub.s32 %s13, 2
      $region64: #{cnnf_forward.1} parent=5 // pred_fallthru
        _
    $region6: #{cnnf_forward.1} parent=1 // loop_footer
      %s17 = sadd.s32 1, %s13
    $region7: #{cnnf_forward.1} parent=1 // loop_footer_branch
      %12 = sbr.rel target = $region3
    $region8: #{cnnf_forward.1} parent=1 // loop_exit
      _
    %2357 = vsyncpa [#allocation4], 1
    %s2358 = scalar_lea.sflag [#allocation4], 1
    %2359 = vsyncpa %s2358, 1
    %2360 = vsyncpa [#allocation5], 1
    %s2361 = scalar_lea.sflag [#allocation5], 1
    %2362 = vsyncpa %s2361, 1

</llo_original>
